<compile_context>
chip_gen: v5e
topology: v5e:2x2
jax: 0.10.0
libtpu: 0.0.40
codegen_flags: <defaults>
</compile_context>

<pallas_src>
import math

import jax
import jax.numpy as jnp
from jax import lax
from jax.experimental import pallas as pl
from jax.experimental.pallas import tpu as pltpu

INPUT_SIZE = 16
HIDDEN_SIZE = 32
NUM_LAYERS = 2
OUTPUT_SIZE = 8
BATCH = 2
SEQ = 8


# ---------------------------------------------------------------------------
# Fused kernel: both LSTM layers (both directions) + linear head.
# ---------------------------------------------------------------------------
def fused_bilstm_kernel(x_ref, wih0_ref, b0_ref, whh0_ref,
                        wih1_ref, b1_ref, whh1_ref,
                        wlin_ref, blin_ref, out_ref, z_ref):
    H = HIDDEN_SIZE
    H4 = 4 * H
    B = BATCH
    S = SEQ
    B2 = 2 * B                     # fwd rows [0:B], bwd rows [B:2B]
    SB2 = S * B2

    # ---- masks, hoisted out of the recurrence -----------------------------
    row_all = lax.broadcasted_iota(jnp.int32, (SB2, H4), 0)
    fwd_all = (row_all % B2) < B                   # fwd vs bwd rows, all steps
    row_step = lax.broadcasted_iota(jnp.int32, (B2, H4), 0)
    fwd_step = row_step < B                        # fwd vs bwd rows, one step
    lane4 = lax.broadcasted_iota(jnp.int32, (B2, H4), 1)
    g_mask = (lane4 >= 2 * H) & (lane4 < 3 * H)    # tanh lanes (gate g)

    def run_layer(x_int, wih_cat, b_cat, whh_bf16, store_output):
        # x_int   : (S*2B, F_in), step-t row block = [x_fwd_t ; x_bwd_{S-1-t}]
        # wih_cat : (F_in, 8H) = [Wih_f^T | Wih_b^T],  b_cat: (1, 8H)
        # whh_bf16: (H, 8H)    = [Whh_f^T | Whh_b^T]   (bf16)
        #
        # Input projection for all timesteps + both directions hoisted out of
        # the recurrence; per-direction column pick + bias folded in one select.
        proj8 = jnp.dot(x_int, wih_cat,
                        preferred_element_type=jnp.float32) + b_cat  # (S*2B,8H)
        xproj = jnp.where(fwd_all, proj8[:, :H4], proj8[:, H4:])     # (S*2B,4H)

        h = jnp.zeros((B2, H), jnp.float32)
        c = jnp.zeros((B2, H), jnp.float32)
        for t in range(S):          # fully unrolled; S is a compile-time const
            # Recurrent matmul (serial chain): bf16 operands, f32 accumulate.
            g8 = jnp.dot(h.astype(jnp.bfloat16), whh_bf16,
                         preferred_element_type=jnp.float32)         # (2B, 8H)
            gates = xproj[t * B2:(t + 1) * B2] + jnp.where(
                fwd_step, g8[:, :H4], g8[:, H4:])                    # (2B, 4H)

            # Single EUP pass: sigmoid(x) == 0.5*tanh(x/2) + 0.5 (exact).
            pre = jnp.where(g_mask, gates, 0.5 * gates)
            tnh = jnp.tanh(pre)
            act = jnp.where(g_mask, tnh, 0.5 * tnh + 0.5)
            i_g = act[:, 0:H]
            f_g = act[:, H:2 * H]
            g_g = act[:, 2 * H:3 * H]
            o_g = act[:, 3 * H:4 * H]

            c = f_g * c + i_g * g_g
            h = o_g * jnp.tanh(c)

            if store_output:
                # Stream next layer's interleaved input straight to VMEM
                # scratch (vst slot, off the dependent chain).
                tb = S - 1 - t
                h_f = h[:B]          # fwd hidden, time t
                h_b = h[B:]          # bwd hidden, time S-1-t
                z_ref[t * B2:t * B2 + B, 0:H] = h_f
                z_ref[t * B2 + B:t * B2 + B2, H:2 * H] = h_b
                z_ref[tb * B2:tb * B2 + B, H:2 * H] = h_b
                z_ref[tb * B2 + B:tb * B2 + B2, 0:H] = h_f
        return h

    # Layer 0: output streamed into the VMEM scratch in layer-1's layout.
    run_layer(x_ref[...], wih0_ref[...], b0_ref[...], whh0_ref[...],
              store_output=True)
    # Layer 1: consumes the scratch.
    h_last = run_layer(z_ref[...], wih1_ref[...], b1_ref[...], whh1_ref[...],
                       store_output=False)

    # hidden = cat(hidden[-2], hidden[-1]) == cat(layer-2 fwd final, bwd final)
    hidden = jnp.concatenate([h_last[:B], h_last[B:]], axis=1)       # (B, 2H)
    out_ref[...] = (jnp.dot(hidden, wlin_ref[...],
                            preferred_element_type=jnp.float32)
                    + blin_ref[...]).astype(out_ref.dtype)


@jax.jit
def lstm_model_forward(x, packed):
    # x: (batch, seq, input_size), batch_first like PyTorch.
    # Build the direction-interleaved time-major layout once in XLA:
    # step-t row block = [x_t (fwd rows) ; x_{S-1-t} (bwd rows)].
    xt = jnp.transpose(x, (1, 0, 2))                       # (S, B, F)
    x_int = jnp.concatenate([xt, xt[::-1]], axis=1)        # (S, 2B, F)
    x_int = x_int.reshape(SEQ * 2 * BATCH, INPUT_SIZE)
    return pl.pallas_call(
        fused_bilstm_kernel,
        out_shape=jax.ShapeDtypeStruct((BATCH, OUTPUT_SIZE), jnp.float32),
        scratch_shapes=[pltpu.VMEM((SEQ * 2 * BATCH, 2 * HIDDEN_SIZE),
                                   jnp.float32)],
    )(x_int,
      packed["wih0"], packed["b0"], packed["whh0"],
      packed["wih1"], packed["b1"], packed["whh1"],
      packed["wlin"], packed["blin"])


# ---------------------------------------------------------------------------
# Parameter init (PyTorch-style uniform(-1/sqrt(H), 1/sqrt(H))) + packing
# ---------------------------------------------------------------------------
def init_raw_params(key):
    k = 1.0 / math.sqrt(HIDDEN_SIZE)
    layers = []
    for layer in range(NUM_LAYERS):
        in_size = INPUT_SIZE if layer == 0 else 2 * HIDDEN_SIZE
        p = {}
        for d in ("f", "b"):
            key, k1, k2, k3, k4 = jax.random.split(key, 5)
            p["wih_" + d] = jax.random.uniform(
                k1, (4 * HIDDEN_SIZE, in_size), jnp.float32, -k, k)
            p["whh_" + d] = jax.random.uniform(
                k2, (4 * HIDDEN_SIZE, HIDDEN_SIZE), jnp.float32, -k, k)
            p["bih_" + d] = jax.random.uniform(
                k3, (4 * HIDDEN_SIZE,), jnp.float32, -k, k)
            p["bhh_" + d] = jax.random.uniform(
                k4, (4 * HIDDEN_SIZE,), jnp.float32, -k, k)
        layers.append(p)
    klin = 1.0 / math.sqrt(2 * HIDDEN_SIZE)
    key, k1, k2 = jax.random.split(key, 3)
    lin = {
        "w": jax.random.uniform(
            k1, (OUTPUT_SIZE, 2 * HIDDEN_SIZE), jnp.float32, -klin, klin),
        "b": jax.random.uniform(k2, (OUTPUT_SIZE,), jnp.float32, -klin, klin),
    }
    return layers, lin


def pack_params(raw_layers, raw_lin):
    packed = {}
    for l, p in enumerate(raw_layers):
        # (in, 8H): columns [0,4H) = forward, [4H,8H) = backward
        packed[f"wih{l}"] = jnp.concatenate(
            [p["wih_f"].T, p["wih_b"].T], axis=1)
        packed[f"b{l}"] = jnp.concatenate(
            [p["bih_f"] + p["bhh_f"], p["bih_b"] + p["bhh_b"]])[None, :]
        # WIDE recurrent packing (H, 8H) = [Whh_f^T | Whh_b^T], bf16 operands.
        packed[f"whh{l}"] = jnp.concatenate(
            [p["whh_f"].T, p["whh_b"].T], axis=1).astype(jnp.bfloat16)
    packed["wlin"] = raw_lin["w"].T            # (2H, out)
    packed["blin"] = raw_lin["b"][None, :]     # (1, out)
    return packed


# ---------------------------------------------------------------------------
# Pure-JAX reference (mirrors PyTorch nn.LSTM bidirectional, eval mode)
# ---------------------------------------------------------------------------
def reference_forward(x, layers, lin):
    def run_dir(seq, wih, whh, bih, bhh):
        S_, B_, _ = seq.shape
        Hh = whh.shape[1]
        h = jnp.zeros((B_, Hh), jnp.float32)
        c = jnp.zeros((B_, Hh), jnp.float32)
        hs = []
        for t in range(S_):
            gates = seq[t] @ wih.T + bih + h @ whh.T + bhh
            i = jax.nn.sigmoid(gates[:, :Hh])
            f = jax.nn.sigmoid(gates[:, Hh:2 * Hh])
            g = jnp.tanh(gates[:, 2 * Hh:3 * Hh])
            o = jax.nn.sigmoid(gates[:, 3 * Hh:])
            c = f * c + i * g
            h = o * jnp.tanh(c)
            hs.append(h)
        return jnp.stack(hs), h

    seq = jnp.transpose(x, (1, 0, 2))
    hf = hb = None
    for p in layers:
        hf_seq, hf = run_dir(seq, p["wih_f"], p["whh_f"], p["bih_f"], p["bhh_f"])
        hb_seq_rev, hb = run_dir(seq[::-1], p["wih_b"], p["whh_b"],
                                 p["bih_b"], p["bhh_b"])
        seq = jnp.concatenate([hf_seq, hb_seq_rev[::-1]], axis=-1)
    hidden = jnp.concatenate([hf, hb], axis=1)
    return hidden @ lin["w"].T + lin["b"]


if __name__ == "__main__":
    key = jax.random.PRNGKey(0)
    key, pkey, xkey = jax.random.split(key, 3)

    raw_layers, raw_lin = init_raw_params(pkey)
    packed = pack_params(raw_layers, raw_lin)
    x = jax.random.normal(xkey, (BATCH, SEQ, INPUT_SIZE), jnp.float32)

    out = lstm_model_forward(x, packed)
    jax.block_until_ready(out)

    assert out.shape == (BATCH, OUTPUT_SIZE), out.shape
    assert out.dtype == jnp.float32

    ref = reference_forward(x, raw_layers, raw_lin)
    # bf16 is used only for the recurrent-matmul operands (f32 accumulate), so
    # the error vs. the all-f32 reference stays ~1e-3; 2e-2 is comfortable.
    max_err = float(jnp.max(jnp.abs(out - ref)))
    assert max_err < 2e-2, f"max abs err vs reference: {max_err}"

    print("KERNEL_OK")
</pallas_src>

<mosaic_0001>
module attributes {stable_mosaic.version = 11 : i64} {
  func.func @fused_bilstm_kernel(%arg0: memref<32x16xf32, #tpu.memory_space<vmem>>, %arg1: memref<16x256xf32, #tpu.memory_space<vmem>>, %arg2: memref<1x256xf32, #tpu.memory_space<vmem>>, %arg3: memref<32x256xbf16, #tpu.memory_space<vmem>>, %arg4: memref<64x256xf32, #tpu.memory_space<vmem>>, %arg5: memref<1x256xf32, #tpu.memory_space<vmem>>, %arg6: memref<32x256xbf16, #tpu.memory_space<vmem>>, %arg7: memref<64x8xf32, #tpu.memory_space<vmem>>, %arg8: memref<1x8xf32, #tpu.memory_space<vmem>>, %arg9: memref<2x8xf32, #tpu.memory_space<vmem>>, %arg10: memref<32x64xf32, #tpu.memory_space<vmem>>) attributes {dimension_semantics = [], scalar_prefetch = 0 : i64, scratch_operands = 1 : i64, tpu.core_type = #tpu.core_type<tc>} {
    %0 = tpu.iota {dimensions = array<i32: 0>} : vector<32x128xi32>
    %c4_i32 = arith.constant 4 : i32
    %c0_i32 = arith.constant 0 : i32
    %1 = arith.cmpi eq, %c4_i32, %c0_i32 : i32
    %c1_i32 = arith.constant 1 : i32
    %2 = arith.select %1, %c1_i32, %c4_i32 : i32
    %3 = vector.broadcast %2 : i32 to vector<32x128xi32>
    %4 = arith.remsi %0, %3 : vector<32x128xi32>
    %c0_i32_0 = arith.constant 0 : i32
    %5 = vector.broadcast %c0_i32_0 : i32 to vector<32x128xi32>
    %6 = arith.cmpi ne, %4, %5 : vector<32x128xi32>
    %c0_i32_1 = arith.constant 0 : i32
    %7 = vector.broadcast %c0_i32_1 : i32 to vector<32x128xi32>
    %8 = arith.cmpi slt, %4, %7 : vector<32x128xi32>
    %c0_i32_2 = arith.constant 0 : i32
    %9 = arith.cmpi slt, %2, %c0_i32_2 : i32
    %10 = vector.broadcast %9 : i1 to vector<32x128xi1>
    %11 = vector.broadcast %10 : vector<32x128xi1> to vector<32x128xi1>
    %12 = arith.xori %8, %11 : vector<32x128xi1>
    %13 = arith.andi %12, %6 : vector<32x128xi1>
    %14 = vector.broadcast %2 : i32 to vector<32x128xi32>
    %15 = arith.addi %4, %14 : vector<32x128xi32>
    %16 = arith.select %13, %15, %4 : vector<32x128xi1>, vector<32x128xi32>
    %c2_i32 = arith.constant 2 : i32
    %17 = vector.broadcast %c2_i32 : i32 to vector<32x128xi32>
    %18 = arith.cmpi slt, %16, %17 : vector<32x128xi32>
    %19 = tpu.iota {dimensions = array<i32: 0>} : vector<4x128xi32>
    %c2_i32_3 = arith.constant 2 : i32
    %20 = vector.broadcast %c2_i32_3 : i32 to vector<4x128xi32>
    %21 = arith.cmpi slt, %19, %20 : vector<4x128xi32>
    %22 = tpu.iota {dimensions = array<i32: 1>} : vector<4x128xi32>
    %c64_i32 = arith.constant 64 : i32
    %23 = vector.broadcast %c64_i32 : i32 to vector<4x128xi32>
    %24 = arith.cmpi sge, %22, %23 : vector<4x128xi32>
    %c96_i32 = arith.constant 96 : i32
    %25 = vector.broadcast %c96_i32 : i32 to vector<4x128xi32>
    %26 = arith.cmpi slt, %22, %25 : vector<4x128xi32>
    %27 = arith.andi %24, %26 : vector<4x128xi1>
    %c0 = arith.constant 0 : index
    %c0_4 = arith.constant 0 : index
    %28 = vector.load %arg0[%c0, %c0_4] : memref<32x16xf32, #tpu.memory_space<vmem>>, vector<32x16xf32>
    %c0_5 = arith.constant 0 : index
    %c0_6 = arith.constant 0 : index
    %29 = vector.load %arg1[%c0_5, %c0_6] : memref<16x256xf32, #tpu.memory_space<vmem>>, vector<16x256xf32>
    %c0_7 = arith.constant 0 : index
    %c0_8 = arith.constant 0 : index
    %30 = vector.load %arg2[%c0_7, %c0_8] : memref<1x256xf32, #tpu.memory_space<vmem>>, vector<1x256xf32>
    %c0_9 = arith.constant 0 : index
    %c0_10 = arith.constant 0 : index
    %31 = vector.load %arg3[%c0_9, %c0_10] : memref<32x256xbf16, #tpu.memory_space<vmem>>, vector<32x256xbf16>
    %cst = arith.constant dense<0.000000e+00> : vector<32x256xf32>
    %32 = tpu.matmul %28, %29, %cst {dimension_numbers = #tpu.dot_dimension_numbers<[1], [0], [0], [1], [0, 0, 1, 1], [], []>} : vector<32x16xf32>, vector<16x256xf32>, vector<32x256xf32> -> vector<32x256xf32>
    %33 = vector.broadcast %30 : vector<1x256xf32> to vector<32x256xf32>
    %34 = arith.addf %32, %33 : vector<32x256xf32>
    %35 = vector.extract_strided_slice %34 {offsets = [0, 0], sizes = [32, 128], strides = [1, 1]} : vector<32x256xf32> to vector<32x128xf32>
    %36 = vector.extract_strided_slice %34 {offsets = [0, 128], sizes = [32, 128], strides = [1, 1]} : vector<32x256xf32> to vector<32x128xf32>
    %37 = arith.select %18, %35, %36 : vector<32x128xi1>, vector<32x128xf32>
    %cst_11 = arith.constant 0.000000e+00 : f32
    %38 = vector.broadcast %cst_11 : f32 to vector<4x32xf32>
    %cst_12 = arith.constant 0.000000e+00 : f32
    %39 = vector.broadcast %cst_12 : f32 to vector<4x32xf32>
    %40 = arith.truncf %38 : vector<4x32xf32> to vector<4x32xbf16>
    %cst_13 = arith.constant dense<0.000000e+00> : vector<4x256xf32>
    %41 = tpu.matmul %40, %31, %cst_13 {dimension_numbers = #tpu.dot_dimension_numbers<[1], [0], [0], [1], [0, 0, 1, 1], [], []>} : vector<4x32xbf16>, vector<32x256xbf16>, vector<4x256xf32> -> vector<4x256xf32>
    %42 = vector.extract_strided_slice %37 {offsets = [0, 0], sizes = [4, 128], strides = [1, 1]} : vector<32x128xf32> to vector<4x128xf32>
    %43 = vector.extract_strided_slice %41 {offsets = [0, 0], sizes = [4, 128], strides = [1, 1]} : vector<4x256xf32> to vector<4x128xf32>
    %44 = vector.extract_strided_slice %41 {offsets = [0, 128], sizes = [4, 128], strides = [1, 1]} : vector<4x256xf32> to vector<4x128xf32>
    %45 = arith.select %21, %43, %44 : vector<4x128xi1>, vector<4x128xf32>
    %46 = arith.addf %42, %45 : vector<4x128xf32>
    %cst_14 = arith.constant 5.000000e-01 : f32
    %47 = vector.broadcast %cst_14 : f32 to vector<4x128xf32>
    %48 = arith.mulf %47, %46 : vector<4x128xf32>
    %49 = arith.select %27, %46, %48 : vector<4x128xi1>, vector<4x128xf32>
    %50 = math.tanh %49 : vector<4x128xf32>
    %cst_15 = arith.constant 5.000000e-01 : f32
    %51 = vector.broadcast %cst_15 : f32 to vector<4x128xf32>
    %52 = arith.mulf %51, %50 : vector<4x128xf32>
    %cst_16 = arith.constant 5.000000e-01 : f32
    %53 = vector.broadcast %cst_16 : f32 to vector<4x128xf32>
    %54 = arith.addf %52, %53 : vector<4x128xf32>
    %55 = arith.select %27, %50, %54 : vector<4x128xi1>, vector<4x128xf32>
    %56 = vector.extract_strided_slice %55 {offsets = [0, 0], sizes = [4, 32], strides = [1, 1]} : vector<4x128xf32> to vector<4x32xf32>
    %57 = vector.extract_strided_slice %55 {offsets = [0, 32], sizes = [4, 32], strides = [1, 1]} : vector<4x128xf32> to vector<4x32xf32>
    %58 = vector.extract_strided_slice %55 {offsets = [0, 64], sizes = [4, 32], strides = [1, 1]} : vector<4x128xf32> to vector<4x32xf32>
    %59 = vector.extract_strided_slice %55 {offsets = [0, 96], sizes = [4, 32], strides = [1, 1]} : vector<4x128xf32> to vector<4x32xf32>
    %60 = arith.mulf %57, %39 : vector<4x32xf32>
    %61 = arith.mulf %56, %58 : vector<4x32xf32>
    %62 = arith.addf %60, %61 : vector<4x32xf32>
    %63 = math.tanh %62 : vector<4x32xf32>
    %64 = arith.mulf %59, %63 : vector<4x32xf32>
    %65 = vector.extract_strided_slice %64 {offsets = [0, 0], sizes = [2, 32], strides = [1, 1]} : vector<4x32xf32> to vector<2x32xf32>
    %66 = vector.extract_strided_slice %64 {offsets = [2, 0], sizes = [2, 32], strides = [1, 1]} : vector<4x32xf32> to vector<2x32xf32>
    %c0_17 = arith.constant 0 : index
    %c0_18 = arith.constant 0 : index
    %67 = vector.load %arg10[%c0_17, %c0_18] : memref<32x64xf32, #tpu.memory_space<vmem>>, vector<2x32xf32>
    tpu.vector_store %arg10[%c0_17, %c0_18], %65 {strides = array<i32>} : memref<32x64xf32, #tpu.memory_space<vmem>>, vector<2x32xf32>,
    %c2 = arith.constant 2 : index
    %c32 = arith.constant 32 : index
    %68 = vector.load %arg10[%c2, %c32] : memref<32x64xf32, #tpu.memory_space<vmem>>, vector<2x32xf32>
    tpu.vector_store %arg10[%c2, %c32], %66 {strides = array<i32>} : memref<32x64xf32, #tpu.memory_space<vmem>>, vector<2x32xf32>,
    %c28 = arith.constant 28 : index
    %c32_19 = arith.constant 32 : index
    %69 = vector.load %arg10[%c28, %c32_19] : memref<32x64xf32, #tpu.memory_space<vmem>>, vector<2x32xf32>
    tpu.vector_store %arg10[%c28, %c32_19], %66 {strides = array<i32>} : memref<32x64xf32, #tpu.memory_space<vmem>>, vector<2x32xf32>,
    %c30 = arith.constant 30 : index
    %c0_20 = arith.constant 0 : index
    %70 = vector.load %arg10[%c30, %c0_20] : memref<32x64xf32, #tpu.memory_space<vmem>>, vector<2x32xf32>
    tpu.vector_store %arg10[%c30, %c0_20], %65 {strides = array<i32>} : memref<32x64xf32, #tpu.memory_space<vmem>>, vector<2x32xf32>,
    %71 = arith.truncf %64 : vector<4x32xf32> to vector<4x32xbf16>
    %cst_21 = arith.constant dense<0.000000e+00> : vector<4x256xf32>
    %72 = tpu.matmul %71, %31, %cst_21 {dimension_numbers = #tpu.dot_dimension_numbers<[1], [0], [0], [1], [0, 0, 1, 1], [], []>} : vector<4x32xbf16>, vector<32x256xbf16>, vector<4x256xf32> -> vector<4x256xf32>
    %73 = vector.extract_strided_slice %37 {offsets = [4, 0], sizes = [4, 128], strides = [1, 1]} : vector<32x128xf32> to vector<4x128xf32>
    %74 = vector.extract_strided_slice %72 {offsets = [0, 0], sizes = [4, 128], strides = [1, 1]} : vector<4x256xf32> to vector<4x128xf32>
    %75 = vector.extract_strided_slice %72 {offsets = [0, 128], sizes = [4, 128], strides = [1, 1]} : vector<4x256xf32> to vector<4x128xf32>
    %76 = arith.select %21, %74, %75 : vector<4x128xi1>, vector<4x128xf32>
    %77 = arith.addf %73, %76 : vector<4x128xf32>
    %cst_22 = arith.constant 5.000000e-01 : f32
    %78 = vector.broadcast %cst_22 : f32 to vector<4x128xf32>
    %79 = arith.mulf %78, %77 : vector<4x128xf32>
    %80 = arith.select %27, %77, %79 : vector<4x128xi1>, vector<4x128xf32>
    %81 = math.tanh %80 : vector<4x128xf32>
    %cst_23 = arith.constant 5.000000e-01 : f32
    %82 = vector.broadcast %cst_23 : f32 to vector<4x128xf32>
    %83 = arith.mulf %82, %81 : vector<4x128xf32>
    %cst_24 = arith.constant 5.000000e-01 : f32
    %84 = vector.broadcast %cst_24 : f32 to vector<4x128xf32>
    %85 = arith.addf %83, %84 : vector<4x128xf32>
    %86 = arith.select %27, %81, %85 : vector<4x128xi1>, vector<4x128xf32>
    %87 = vector.extract_strided_slice %86 {offsets = [0, 0], sizes = [4, 32], strides = [1, 1]} : vector<4x128xf32> to vector<4x32xf32>
    %88 = vector.extract_strided_slice %86 {offsets = [0, 32], sizes = [4, 32], strides = [1, 1]} : vector<4x128xf32> to vector<4x32xf32>
    %89 = vector.extract_strided_slice %86 {offsets = [0, 64], sizes = [4, 32], strides = [1, 1]} : vector<4x128xf32> to vector<4x32xf32>
    %90 = vector.extract_strided_slice %86 {offsets = [0, 96], sizes = [4, 32], strides = [1, 1]} : vector<4x128xf32> to vector<4x32xf32>
    %91 = arith.mulf %88, %62 : vector<4x32xf32>
    %92 = arith.mulf %87, %89 : vector<4x32xf32>
    %93 = arith.addf %91, %92 : vector<4x32xf32>
    %94 = math.tanh %93 : vector<4x32xf32>
    %95 = arith.mulf %90, %94 : vector<4x32xf32>
    %96 = vector.extract_strided_slice %95 {offsets = [0, 0], sizes = [2, 32], strides = [1, 1]} : vector<4x32xf32> to vector<2x32xf32>
    %97 = vector.extract_strided_slice %95 {offsets = [2, 0], sizes = [2, 32], strides = [1, 1]} : vector<4x32xf32> to vector<2x32xf32>
    %c4 = arith.constant 4 : index
    %c0_25 = arith.constant 0 : index
    %98 = vector.load %arg10[%c4, %c0_25] : memref<32x64xf32, #tpu.memory_space<vmem>>, vector<2x32xf32>
    tpu.vector_store %arg10[%c4, %c0_25], %96 {strides = array<i32>} : memref<32x64xf32, #tpu.memory_space<vmem>>, vector<2x32xf32>,
    %c6 = arith.constant 6 : index
    %c32_26 = arith.constant 32 : index
    %99 = vector.load %arg10[%c6, %c32_26] : memref<32x64xf32, #tpu.memory_space<vmem>>, vector<2x32xf32>
    tpu.vector_store %arg10[%c6, %c32_26], %97 {strides = array<i32>} : memref<32x64xf32, #tpu.memory_space<vmem>>, vector<2x32xf32>,
    %c24 = arith.constant 24 : index
    %c32_27 = arith.constant 32 : index
    %100 = vector.load %arg10[%c24, %c32_27] : memref<32x64xf32, #tpu.memory_space<vmem>>, vector<2x32xf32>
    tpu.vector_store %arg10[%c24, %c32_27], %97 {strides = array<i32>} : memref<32x64xf32, #tpu.memory_space<vmem>>, vector<2x32xf32>,
    %c26 = arith.constant 26 : index
    %c0_28 = arith.constant 0 : index
    %101 = vector.load %arg10[%c26, %c0_28] : memref<32x64xf32, #tpu.memory_space<vmem>>, vector<2x32xf32>
    tpu.vector_store %arg10[%c26, %c0_28], %96 {strides = array<i32>} : memref<32x64xf32, #tpu.memory_space<vmem>>, vector<2x32xf32>,
    %102 = arith.truncf %95 : vector<4x32xf32> to vector<4x32xbf16>
    %cst_29 = arith.constant dense<0.000000e+00> : vector<4x256xf32>
    %103 = tpu.matmul %102, %31, %cst_29 {dimension_numbers = #tpu.dot_dimension_numbers<[1], [0], [0], [1], [0, 0, 1, 1], [], []>} : vector<4x32xbf16>, vector<32x256xbf16>, vector<4x256xf32> -> vector<4x256xf32>
    %104 = vector.extract_strided_slice %37 {offsets = [8, 0], sizes = [4, 128], strides = [1, 1]} : vector<32x128xf32> to vector<4x128xf32>
    %105 = vector.extract_strided_slice %103 {offsets = [0, 0], sizes = [4, 128], strides = [1, 1]} : vector<4x256xf32> to vector<4x128xf32>
    %106 = vector.extract_strided_slice %103 {offsets = [0, 128], sizes = [4, 128], strides = [1, 1]} : vector<4x256xf32> to vector<4x128xf32>
    %107 = arith.select %21, %105, %106 : vector<4x128xi1>, vector<4x128xf32>
    %108 = arith.addf %104, %107 : vector<4x128xf32>
    %cst_30 = arith.constant 5.000000e-01 : f32
    %109 = vector.broadcast %cst_30 : f32 to vector<4x128xf32>
    %110 = arith.mulf %109, %108 : vector<4x128xf32>
    %111 = arith.select %27, %108, %110 : vector<4x128xi1>, vector<4x128xf32>
    %112 = math.tanh %111 : vector<4x128xf32>
    %cst_31 = arith.constant 5.000000e-01 : f32
    %113 = vector.broadcast %cst_31 : f32 to vector<4x128xf32>
    %114 = arith.mulf %113, %112 : vector<4x128xf32>
    %cst_32 = arith.constant 5.000000e-01 : f32
    %115 = vector.broadcast %cst_32 : f32 to vector<4x128xf32>
    %116 = arith.addf %114, %115 : vector<4x128xf32>
    %117 = arith.select %27, %112, %116 : vector<4x128xi1>, vector<4x128xf32>
    %118 = vector.extract_strided_slice %117 {offsets = [0, 0], sizes = [4, 32], strides = [1, 1]} : vector<4x128xf32> to vector<4x32xf32>
    %119 = vector.extract_strided_slice %117 {offsets = [0, 32], sizes = [4, 32], strides = [1, 1]} : vector<4x128xf32> to vector<4x32xf32>
    %120 = vector.extract_strided_slice %117 {offsets = [0, 64], sizes = [4, 32], strides = [1, 1]} : vector<4x128xf32> to vector<4x32xf32>
    %121 = vector.extract_strided_slice %117 {offsets = [0, 96], sizes = [4, 32], strides = [1, 1]} : vector<4x128xf32> to vector<4x32xf32>
    %122 = arith.mulf %119, %93 : vector<4x32xf32>
    %123 = arith.mulf %118, %120 : vector<4x32xf32>
    %124 = arith.addf %122, %123 : vector<4x32xf32>
    %125 = math.tanh %124 : vector<4x32xf32>
    %126 = arith.mulf %121, %125 : vector<4x32xf32>
    %127 = vector.extract_strided_slice %126 {offsets = [0, 0], sizes = [2, 32], strides = [1, 1]} : vector<4x32xf32> to vector<2x32xf32>
    %128 = vector.extract_strided_slice %126 {offsets = [2, 0], sizes = [2, 32], strides = [1, 1]} : vector<4x32xf32> to vector<2x32xf32>
    %c8 = arith.constant 8 : index
    %c0_33 = arith.constant 0 : index
    %129 = vector.load %arg10[%c8, %c0_33] : memref<32x64xf32, #tpu.memory_space<vmem>>, vector<2x32xf32>
    tpu.vector_store %arg10[%c8, %c0_33], %127 {strides = array<i32>} : memref<32x64xf32, #tpu.memory_space<vmem>>, vector<2x32xf32>,
    %c10 = arith.constant 10 : index
    %c32_34 = arith.constant 32 : index
    %130 = vector.load %arg10[%c10, %c32_34] : memref<32x64xf32, #tpu.memory_space<vmem>>, vector<2x32xf32>
    tpu.vector_store %arg10[%c10, %c32_34], %128 {strides = array<i32>} : memref<32x64xf32, #tpu.memory_space<vmem>>, vector<2x32xf32>,
    %c20 = arith.constant 20 : index
    %c32_35 = arith.constant 32 : index
    %131 = vector.load %arg10[%c20, %c32_35] : memref<32x64xf32, #tpu.memory_space<vmem>>, vector<2x32xf32>
    tpu.vector_store %arg10[%c20, %c32_35], %128 {strides = array<i32>} : memref<32x64xf32, #tpu.memory_space<vmem>>, vector<2x32xf32>,
    %c22 = arith.constant 22 : index
    %c0_36 = arith.constant 0 : index
    %132 = vector.load %arg10[%c22, %c0_36] : memref<32x64xf32, #tpu.memory_space<vmem>>, vector<2x32xf32>
    tpu.vector_store %arg10[%c22, %c0_36], %127 {strides = array<i32>} : memref<32x64xf32, #tpu.memory_space<vmem>>, vector<2x32xf32>,
    %133 = arith.truncf %126 : vector<4x32xf32> to vector<4x32xbf16>
    %cst_37 = arith.constant dense<0.000000e+00> : vector<4x256xf32>
    %134 = tpu.matmul %133, %31, %cst_37 {dimension_numbers = #tpu.dot_dimension_numbers<[1], [0], [0], [1], [0, 0, 1, 1], [], []>} : vector<4x32xbf16>, vector<32x256xbf16>, vector<4x256xf32> -> vector<4x256xf32>
    %135 = vector.extract_strided_slice %37 {offsets = [12, 0], sizes = [4, 128], strides = [1, 1]} : vector<32x128xf32> to vector<4x128xf32>
    %136 = vector.extract_strided_slice %134 {offsets = [0, 0], sizes = [4, 128], strides = [1, 1]} : vector<4x256xf32> to vector<4x128xf32>
    %137 = vector.extract_strided_slice %134 {offsets = [0, 128], sizes = [4, 128], strides = [1, 1]} : vector<4x256xf32> to vector<4x128xf32>
    %138 = arith.select %21, %136, %137 : vector<4x128xi1>, vector<4x128xf32>
    %139 = arith.addf %135, %138 : vector<4x128xf32>
    %cst_38 = arith.constant 5.000000e-01 : f32
    %140 = vector.broadcast %cst_38 : f32 to vector<4x128xf32>
    %141 = arith.mulf %140, %139 : vector<4x128xf32>
    %142 = arith.select %27, %139, %141 : vector<4x128xi1>, vector<4x128xf32>
    %143 = math.tanh %142 : vector<4x128xf32>
    %cst_39 = arith.constant 5.000000e-01 : f32
    %144 = vector.broadcast %cst_39 : f32 to vector<4x128xf32>
    %145 = arith.mulf %144, %143 : vector<4x128xf32>
    %cst_40 = arith.constant 5.000000e-01 : f32
    %146 = vector.broadcast %cst_40 : f32 to vector<4x128xf32>
    %147 = arith.addf %145, %146 : vector<4x128xf32>
    %148 = arith.select %27, %143, %147 : vector<4x128xi1>, vector<4x128xf32>
    %149 = vector.extract_strided_slice %148 {offsets = [0, 0], sizes = [4, 32], strides = [1, 1]} : vector<4x128xf32> to vector<4x32xf32>
    %150 = vector.extract_strided_slice %148 {offsets = [0, 32], sizes = [4, 32], strides = [1, 1]} : vector<4x128xf32> to vector<4x32xf32>
    %151 = vector.extract_strided_slice %148 {offsets = [0, 64], sizes = [4, 32], strides = [1, 1]} : vector<4x128xf32> to vector<4x32xf32>
    %152 = vector.extract_strided_slice %148 {offsets = [0, 96], sizes = [4, 32], strides = [1, 1]} : vector<4x128xf32> to vector<4x32xf32>
    %153 = arith.mulf %150, %124 : vector<4x32xf32>
    %154 = arith.mulf %149, %151 : vector<4x32xf32>
    %155 = arith.addf %153, %154 : vector<4x32xf32>
    %156 = math.tanh %155 : vector<4x32xf32>
    %157 = arith.mulf %152, %156 : vector<4x32xf32>
    %158 = vector.extract_strided_slice %157 {offsets = [0, 0], sizes = [2, 32], strides = [1, 1]} : vector<4x32xf32> to vector<2x32xf32>
    %159 = vector.extract_strided_slice %157 {offsets = [2, 0], sizes = [2, 32], strides = [1, 1]} : vector<4x32xf32> to vector<2x32xf32>
    %c12 = arith.constant 12 : index
    %c0_41 = arith.constant 0 : index
    %160 = vector.load %arg10[%c12, %c0_41] : memref<32x64xf32, #tpu.memory_space<vmem>>, vector<2x32xf32>
    tpu.vector_store %arg10[%c12, %c0_41], %158 {strides = array<i32>} : memref<32x64xf32, #tpu.memory_space<vmem>>, vector<2x32xf32>,
    %c14 = arith.constant 14 : index
    %c32_42 = arith.constant 32 : index
    %161 = vector.load %arg10[%c14, %c32_42] : memref<32x64xf32, #tpu.memory_space<vmem>>, vector<2x32xf32>
    tpu.vector_store %arg10[%c14, %c32_42], %159 {strides = array<i32>} : memref<32x64xf32, #tpu.memory_space<vmem>>, vector<2x32xf32>,
    %c16 = arith.constant 16 : index
    %c32_43 = arith.constant 32 : index
    %162 = vector.load %arg10[%c16, %c32_43] : memref<32x64xf32, #tpu.memory_space<vmem>>, vector<2x32xf32>
    tpu.vector_store %arg10[%c16, %c32_43], %159 {strides = array<i32>} : memref<32x64xf32, #tpu.memory_space<vmem>>, vector<2x32xf32>,
    %c18 = arith.constant 18 : index
    %c0_44 = arith.constant 0 : index
    %163 = vector.load %arg10[%c18, %c0_44] : memref<32x64xf32, #tpu.memory_space<vmem>>, vector<2x32xf32>
    tpu.vector_store %arg10[%c18, %c0_44], %158 {strides = array<i32>} : memref<32x64xf32, #tpu.memory_space<vmem>>, vector<2x32xf32>,
    %164 = arith.truncf %157 : vector<4x32xf32> to vector<4x32xbf16>
    %cst_45 = arith.constant dense<0.000000e+00> : vector<4x256xf32>
    %165 = tpu.matmul %164, %31, %cst_45 {dimension_numbers = #tpu.dot_dimension_numbers<[1], [0], [0], [1], [0, 0, 1, 1], [], []>} : vector<4x32xbf16>, vector<32x256xbf16>, vector<4x256xf32> -> vector<4x256xf32>
    %166 = vector.extract_strided_slice %37 {offsets = [16, 0], sizes = [4, 128], strides = [1, 1]} : vector<32x128xf32> to vector<4x128xf32>
    %167 = vector.extract_strided_slice %165 {offsets = [0, 0], sizes = [4, 128], strides = [1, 1]} : vector<4x256xf32> to vector<4x128xf32>
    %168 = vector.extract_strided_slice %165 {offsets = [0, 128], sizes = [4, 128], strides = [1, 1]} : vector<4x256xf32> to vector<4x128xf32>
    %169 = arith.select %21, %167, %168 : vector<4x128xi1>, vector<4x128xf32>
    %170 = arith.addf %166, %169 : vector<4x128xf32>
    %cst_46 = arith.constant 5.000000e-01 : f32
    %171 = vector.broadcast %cst_46 : f32 to vector<4x128xf32>
    %172 = arith.mulf %171, %170 : vector<4x128xf32>
    %173 = arith.select %27, %170, %172 : vector<4x128xi1>, vector<4x128xf32>
    %174 = math.tanh %173 : vector<4x128xf32>
    %cst_47 = arith.constant 5.000000e-01 : f32
    %175 = vector.broadcast %cst_47 : f32 to vector<4x128xf32>
    %176 = arith.mulf %175, %174 : vector<4x128xf32>
    %cst_48 = arith.constant 5.000000e-01 : f32
    %177 = vector.broadcast %cst_48 : f32 to vector<4x128xf32>
    %178 = arith.addf %176, %177 : vector<4x128xf32>
    %179 = arith.select %27, %174, %178 : vector<4x128xi1>, vector<4x128xf32>
    %180 = vector.extract_strided_slice %179 {offsets = [0, 0], sizes = [4, 32], strides = [1, 1]} : vector<4x128xf32> to vector<4x32xf32>
    %181 = vector.extract_strided_slice %179 {offsets = [0, 32], sizes = [4, 32], strides = [1, 1]} : vector<4x128xf32> to vector<4x32xf32>
    %182 = vector.extract_strided_slice %179 {offsets = [0, 64], sizes = [4, 32], strides = [1, 1]} : vector<4x128xf32> to vector<4x32xf32>
    %183 = vector.extract_strided_slice %179 {offsets = [0, 96], sizes = [4, 32], strides = [1, 1]} : vector<4x128xf32> to vector<4x32xf32>
    %184 = arith.mulf %181, %155 : vector<4x32xf32>
    %185 = arith.mulf %180, %182 : vector<4x32xf32>
    %186 = arith.addf %184, %185 : vector<4x32xf32>
    %187 = math.tanh %186 : vector<4x32xf32>
    %188 = arith.mulf %183, %187 : vector<4x32xf32>
    %189 = vector.extract_strided_slice %188 {offsets = [0, 0], sizes = [2, 32], strides = [1, 1]} : vector<4x32xf32> to vector<2x32xf32>
    %190 = vector.extract_strided_slice %188 {offsets = [2, 0], sizes = [2, 32], strides = [1, 1]} : vector<4x32xf32> to vector<2x32xf32>
    %c16_49 = arith.constant 16 : index
    %c0_50 = arith.constant 0 : index
    %191 = vector.load %arg10[%c16_49, %c0_50] : memref<32x64xf32, #tpu.memory_space<vmem>>, vector<2x32xf32>
    tpu.vector_store %arg10[%c16_49, %c0_50], %189 {strides = array<i32>} : memref<32x64xf32, #tpu.memory_space<vmem>>, vector<2x32xf32>,
    %c18_51 = arith.constant 18 : index
    %c32_52 = arith.constant 32 : index
    %192 = vector.load %arg10[%c18_51, %c32_52] : memref<32x64xf32, #tpu.memory_space<vmem>>, vector<2x32xf32>
    tpu.vector_store %arg10[%c18_51, %c32_52], %190 {strides = array<i32>} : memref<32x64xf32, #tpu.memory_space<vmem>>, vector<2x32xf32>,
    %c12_53 = arith.constant 12 : index
    %c32_54 = arith.constant 32 : index
    %193 = vector.load %arg10[%c12_53, %c32_54] : memref<32x64xf32, #tpu.memory_space<vmem>>, vector<2x32xf32>
    tpu.vector_store %arg10[%c12_53, %c32_54], %190 {strides = array<i32>} : memref<32x64xf32, #tpu.memory_space<vmem>>, vector<2x32xf32>,
    %c14_55 = arith.constant 14 : index
    %c0_56 = arith.constant 0 : index
    %194 = vector.load %arg10[%c14_55, %c0_56] : memref<32x64xf32, #tpu.memory_space<vmem>>, vector<2x32xf32>
    tpu.vector_store %arg10[%c14_55, %c0_56], %189 {strides = array<i32>} : memref<32x64xf32, #tpu.memory_space<vmem>>, vector<2x32xf32>,
    %195 = arith.truncf %188 : vector<4x32xf32> to vector<4x32xbf16>
    %cst_57 = arith.constant dense<0.000000e+00> : vector<4x256xf32>
    %196 = tpu.matmul %195, %31, %cst_57 {dimension_numbers = #tpu.dot_dimension_numbers<[1], [0], [0], [1], [0, 0, 1, 1], [], []>} : vector<4x32xbf16>, vector<32x256xbf16>, vector<4x256xf32> -> vector<4x256xf32>
    %197 = vector.extract_strided_slice %37 {offsets = [20, 0], sizes = [4, 128], strides = [1, 1]} : vector<32x128xf32> to vector<4x128xf32>
    %198 = vector.extract_strided_slice %196 {offsets = [0, 0], sizes = [4, 128], strides = [1, 1]} : vector<4x256xf32> to vector<4x128xf32>
    %199 = vector.extract_strided_slice %196 {offsets = [0, 128], sizes = [4, 128], strides = [1, 1]} : vector<4x256xf32> to vector<4x128xf32>
    %200 = arith.select %21, %198, %199 : vector<4x128xi1>, vector<4x128xf32>
    %201 = arith.addf %197, %200 : vector<4x128xf32>
    %cst_58 = arith.constant 5.000000e-01 : f32
    %202 = vector.broadcast %cst_58 : f32 to vector<4x128xf32>
    %203 = arith.mulf %202, %201 : vector<4x128xf32>
    %204 = arith.select %27, %201, %203 : vector<4x128xi1>, vector<4x128xf32>
    %205 = math.tanh %204 : vector<4x128xf32>
    %cst_59 = arith.constant 5.000000e-01 : f32
    %206 = vector.broadcast %cst_59 : f32 to vector<4x128xf32>
    %207 = arith.mulf %206, %205 : vector<4x128xf32>
    %cst_60 = arith.constant 5.000000e-01 : f32
    %208 = vector.broadcast %cst_60 : f32 to vector<4x128xf32>
    %209 = arith.addf %207, %208 : vector<4x128xf32>
    %210 = arith.select %27, %205, %209 : vector<4x128xi1>, vector<4x128xf32>
    %211 = vector.extract_strided_slice %210 {offsets = [0, 0], sizes = [4, 32], strides = [1, 1]} : vector<4x128xf32> to vector<4x32xf32>
    %212 = vector.extract_strided_slice %210 {offsets = [0, 32], sizes = [4, 32], strides = [1, 1]} : vector<4x128xf32> to vector<4x32xf32>
    %213 = vector.extract_strided_slice %210 {offsets = [0, 64], sizes = [4, 32], strides = [1, 1]} : vector<4x128xf32> to vector<4x32xf32>
    %214 = vector.extract_strided_slice %210 {offsets = [0, 96], sizes = [4, 32], strides = [1, 1]} : vector<4x128xf32> to vector<4x32xf32>
    %215 = arith.mulf %212, %186 : vector<4x32xf32>
    %216 = arith.mulf %211, %213 : vector<4x32xf32>
    %217 = arith.addf %215, %216 : vector<4x32xf32>
    %218 = math.tanh %217 : vector<4x32xf32>
    %219 = arith.mulf %214, %218 : vector<4x32xf32>
    %220 = vector.extract_strided_slice %219 {offsets = [0, 0], sizes = [2, 32], strides = [1, 1]} : vector<4x32xf32> to vector<2x32xf32>
    %221 = vector.extract_strided_slice %219 {offsets = [2, 0], sizes = [2, 32], strides = [1, 1]} : vector<4x32xf32> to vector<2x32xf32>
    %c20_61 = arith.constant 20 : index
    %c0_62 = arith.constant 0 : index
    %222 = vector.load %arg10[%c20_61, %c0_62] : memref<32x64xf32, #tpu.memory_space<vmem>>, vector<2x32xf32>
    tpu.vector_store %arg10[%c20_61, %c0_62], %220 {strides = array<i32>} : memref<32x64xf32, #tpu.memory_space<vmem>>, vector<2x32xf32>,
    %c22_63 = arith.constant 22 : index
    %c32_64 = arith.constant 32 : index
    %223 = vector.load %arg10[%c22_63, %c32_64] : memref<32x64xf32, #tpu.memory_space<vmem>>, vector<2x32xf32>
    tpu.vector_store %arg10[%c22_63, %c32_64], %221 {strides = array<i32>} : memref<32x64xf32, #tpu.memory_space<vmem>>, vector<2x32xf32>,
    %c8_65 = arith.constant 8 : index
    %c32_66 = arith.constant 32 : index
    %224 = vector.load %arg10[%c8_65, %c32_66] : memref<32x64xf32, #tpu.memory_space<vmem>>, vector<2x32xf32>
    tpu.vector_store %arg10[%c8_65, %c32_66], %221 {strides = array<i32>} : memref<32x64xf32, #tpu.memory_space<vmem>>, vector<2x32xf32>,
    %c10_67 = arith.constant 10 : index
    %c0_68 = arith.constant 0 : index
    %225 = vector.load %arg10[%c10_67, %c0_68] : memref<32x64xf32, #tpu.memory_space<vmem>>, vector<2x32xf32>
    tpu.vector_store %arg10[%c10_67, %c0_68], %220 {strides = array<i32>} : memref<32x64xf32, #tpu.memory_space<vmem>>, vector<2x32xf32>,
    %226 = arith.truncf %219 : vector<4x32xf32> to vector<4x32xbf16>
    %cst_69 = arith.constant dense<0.000000e+00> : vector<4x256xf32>
    %227 = tpu.matmul %226, %31, %cst_69 {dimension_numbers = #tpu.dot_dimension_numbers<[1], [0], [0], [1], [0, 0, 1, 1], [], []>} : vector<4x32xbf16>, vector<32x256xbf16>, vector<4x256xf32> -> vector<4x256xf32>
    %228 = vector.extract_strided_slice %37 {offsets = [24, 0], sizes = [4, 128], strides = [1, 1]} : vector<32x128xf32> to vector<4x128xf32>
    %229 = vector.extract_strided_slice %227 {offsets = [0, 0], sizes = [4, 128], strides = [1, 1]} : vector<4x256xf32> to vector<4x128xf32>
    %230 = vector.extract_strided_slice %227 {offsets = [0, 128], sizes = [4, 128], strides = [1, 1]} : vector<4x256xf32> to vector<4x128xf32>
    %231 = arith.select %21, %229, %230 : vector<4x128xi1>, vector<4x128xf32>
    %232 = arith.addf %228, %231 : vector<4x128xf32>
    %cst_70 = arith.constant 5.000000e-01 : f32
    %233 = vector.broadcast %cst_70 : f32 to vector<4x128xf32>
    %234 = arith.mulf %233, %232 : vector<4x128xf32>
    %235 = arith.select %27, %232, %234 : vector<4x128xi1>, vector<4x128xf32>
    %236 = math.tanh %235 : vector<4x128xf32>
    %cst_71 = arith.constant 5.000000e-01 : f32
    %237 = vector.broadcast %cst_71 : f32 to vector<4x128xf32>
    %238 = arith.mulf %237, %236 : vector<4x128xf32>
    %cst_72 = arith.constant 5.000000e-01 : f32
    %239 = vector.broadcast %cst_72 : f32 to vector<4x128xf32>
    %240 = arith.addf %238, %239 : vector<4x128xf32>
    %241 = arith.select %27, %236, %240 : vector<4x128xi1>, vector<4x128xf32>
    %242 = vector.extract_strided_slice %241 {offsets = [0, 0], sizes = [4, 32], strides = [1, 1]} : vector<4x128xf32> to vector<4x32xf32>
    %243 = vector.extract_strided_slice %241 {offsets = [0, 32], sizes = [4, 32], strides = [1, 1]} : vector<4x128xf32> to vector<4x32xf32>
    %244 = vector.extract_strided_slice %241 {offsets = [0, 64], sizes = [4, 32], strides = [1, 1]} : vector<4x128xf32> to vector<4x32xf32>
    %245 = vector.extract_strided_slice %241 {offsets = [0, 96], sizes = [4, 32], strides = [1, 1]} : vector<4x128xf32> to vector<4x32xf32>
    %246 = arith.mulf %243, %217 : vector<4x32xf32>
    %247 = arith.mulf %242, %244 : vector<4x32xf32>
    %248 = arith.addf %246, %247 : vector<4x32xf32>
    %249 = math.tanh %248 : vector<4x32xf32>
    %250 = arith.mulf %245, %249 : vector<4x32xf32>
    %251 = vector.extract_strided_slice %250 {offsets = [0, 0], sizes = [2, 32], strides = [1, 1]} : vector<4x32xf32> to vector<2x32xf32>
    %252 = vector.extract_strided_slice %250 {offsets = [2, 0], sizes = [2, 32], strides = [1, 1]} : vector<4x32xf32> to vector<2x32xf32>
    %c24_73 = arith.constant 24 : index
    %c0_74 = arith.constant 0 : index
    %253 = vector.load %arg10[%c24_73, %c0_74] : memref<32x64xf32, #tpu.memory_space<vmem>>, vector<2x32xf32>
    tpu.vector_store %arg10[%c24_73, %c0_74], %251 {strides = array<i32>} : memref<32x64xf32, #tpu.memory_space<vmem>>, vector<2x32xf32>,
    %c26_75 = arith.constant 26 : index
    %c32_76 = arith.constant 32 : index
    %254 = vector.load %arg10[%c26_75, %c32_76] : memref<32x64xf32, #tpu.memory_space<vmem>>, vector<2x32xf32>
    tpu.vector_store %arg10[%c26_75, %c32_76], %252 {strides = array<i32>} : memref<32x64xf32, #tpu.memory_space<vmem>>, vector<2x32xf32>,
    %c4_77 = arith.constant 4 : index
    %c32_78 = arith.constant 32 : index
    %255 = vector.load %arg10[%c4_77, %c32_78] : memref<32x64xf32, #tpu.memory_space<vmem>>, vector<2x32xf32>
    tpu.vector_store %arg10[%c4_77, %c32_78], %252 {strides = array<i32>} : memref<32x64xf32, #tpu.memory_space<vmem>>, vector<2x32xf32>,
    %c6_79 = arith.constant 6 : index
    %c0_80 = arith.constant 0 : index
    %256 = vector.load %arg10[%c6_79, %c0_80] : memref<32x64xf32, #tpu.memory_space<vmem>>, vector<2x32xf32>
    tpu.vector_store %arg10[%c6_79, %c0_80], %251 {strides = array<i32>} : memref<32x64xf32, #tpu.memory_space<vmem>>, vector<2x32xf32>,
    %257 = arith.truncf %250 : vector<4x32xf32> to vector<4x32xbf16>
    %cst_81 = arith.constant dense<0.000000e+00> : vector<4x256xf32>
    %258 = tpu.matmul %257, %31, %cst_81 {dimension_numbers = #tpu.dot_dimension_numbers<[1], [0], [0], [1], [0, 0, 1, 1], [], []>} : vector<4x32xbf16>, vector<32x256xbf16>, vector<4x256xf32> -> vector<4x256xf32>
    %259 = vector.extract_strided_slice %37 {offsets = [28, 0], sizes = [4, 128], strides = [1, 1]} : vector<32x128xf32> to vector<4x128xf32>
    %260 = vector.extract_strided_slice %258 {offsets = [0, 0], sizes = [4, 128], strides = [1, 1]} : vector<4x256xf32> to vector<4x128xf32>
    %261 = vector.extract_strided_slice %258 {offsets = [0, 128], sizes = [4, 128], strides = [1, 1]} : vector<4x256xf32> to vector<4x128xf32>
    %262 = arith.select %21, %260, %261 : vector<4x128xi1>, vector<4x128xf32>
    %263 = arith.addf %259, %262 : vector<4x128xf32>
    %cst_82 = arith.constant 5.000000e-01 : f32
    %264 = vector.broadcast %cst_82 : f32 to vector<4x128xf32>
    %265 = arith.mulf %264, %263 : vector<4x128xf32>
    %266 = arith.select %27, %263, %265 : vector<4x128xi1>, vector<4x128xf32>
    %267 = math.tanh %266 : vector<4x128xf32>
    %cst_83 = arith.constant 5.000000e-01 : f32
    %268 = vector.broadcast %cst_83 : f32 to vector<4x128xf32>
    %269 = arith.mulf %268, %267 : vector<4x128xf32>
    %cst_84 = arith.constant 5.000000e-01 : f32
    %270 = vector.broadcast %cst_84 : f32 to vector<4x128xf32>
    %271 = arith.addf %269, %270 : vector<4x128xf32>
    %272 = arith.select %27, %267, %271 : vector<4x128xi1>, vector<4x128xf32>
    %273 = vector.extract_strided_slice %272 {offsets = [0, 0], sizes = [4, 32], strides = [1, 1]} : vector<4x128xf32> to vector<4x32xf32>
    %274 = vector.extract_strided_slice %272 {offsets = [0, 32], sizes = [4, 32], strides = [1, 1]} : vector<4x128xf32> to vector<4x32xf32>
    %275 = vector.extract_strided_slice %272 {offsets = [0, 64], sizes = [4, 32], strides = [1, 1]} : vector<4x128xf32> to vector<4x32xf32>
    %276 = vector.extract_strided_slice %272 {offsets = [0, 96], sizes = [4, 32], strides = [1, 1]} : vector<4x128xf32> to vector<4x32xf32>
    %277 = arith.mulf %274, %248 : vector<4x32xf32>
    %278 = arith.mulf %273, %275 : vector<4x32xf32>
    %279 = arith.addf %277, %278 : vector<4x32xf32>
    %280 = math.tanh %279 : vector<4x32xf32>
    %281 = arith.mulf %276, %280 : vector<4x32xf32>
    %282 = vector.extract_strided_slice %281 {offsets = [0, 0], sizes = [2, 32], strides = [1, 1]} : vector<4x32xf32> to vector<2x32xf32>
    %283 = vector.extract_strided_slice %281 {offsets = [2, 0], sizes = [2, 32], strides = [1, 1]} : vector<4x32xf32> to vector<2x32xf32>
    %c28_85 = arith.constant 28 : index
    %c0_86 = arith.constant 0 : index
    %284 = vector.load %arg10[%c28_85, %c0_86] : memref<32x64xf32, #tpu.memory_space<vmem>>, vector<2x32xf32>
    tpu.vector_store %arg10[%c28_85, %c0_86], %282 {strides = array<i32>} : memref<32x64xf32, #tpu.memory_space<vmem>>, vector<2x32xf32>,
    %c30_87 = arith.constant 30 : index
    %c32_88 = arith.constant 32 : index
    %285 = vector.load %arg10[%c30_87, %c32_88] : memref<32x64xf32, #tpu.memory_space<vmem>>, vector<2x32xf32>
    tpu.vector_store %arg10[%c30_87, %c32_88], %283 {strides = array<i32>} : memref<32x64xf32, #tpu.memory_space<vmem>>, vector<2x32xf32>,
    %c0_89 = arith.constant 0 : index
    %c32_90 = arith.constant 32 : index
    %286 = vector.load %arg10[%c0_89, %c32_90] : memref<32x64xf32, #tpu.memory_space<vmem>>, vector<2x32xf32>
    tpu.vector_store %arg10[%c0_89, %c32_90], %283 {strides = array<i32>} : memref<32x64xf32, #tpu.memory_space<vmem>>, vector<2x32xf32>,
    %c2_91 = arith.constant 2 : index
    %c0_92 = arith.constant 0 : index
    %287 = vector.load %arg10[%c2_91, %c0_92] : memref<32x64xf32, #tpu.memory_space<vmem>>, vector<2x32xf32>
    tpu.vector_store %arg10[%c2_91, %c0_92], %282 {strides = array<i32>} : memref<32x64xf32, #tpu.memory_space<vmem>>, vector<2x32xf32>,
    %c0_93 = arith.constant 0 : index
    %c0_94 = arith.constant 0 : index
    %288 = vector.load %arg10[%c0_93, %c0_94] : memref<32x64xf32, #tpu.memory_space<vmem>>, vector<32x64xf32>
    %c0_95 = arith.constant 0 : index
    %c0_96 = arith.constant 0 : index
    %289 = vector.load %arg4[%c0_95, %c0_96] : memref<64x256xf32, #tpu.memory_space<vmem>>, vector<64x256xf32>
    %c0_97 = arith.constant 0 : index
    %c0_98 = arith.constant 0 : index
    %290 = vector.load %arg5[%c0_97, %c0_98] : memref<1x256xf32, #tpu.memory_space<vmem>>, vector<1x256xf32>
    %c0_99 = arith.constant 0 : index
    %c0_100 = arith.constant 0 : index
    %291 = vector.load %arg6[%c0_99, %c0_100] : memref<32x256xbf16, #tpu.memory_space<vmem>>, vector<32x256xbf16>
    %cst_101 = arith.constant dense<0.000000e+00> : vector<32x256xf32>
    %292 = tpu.matmul %288, %289, %cst_101 {dimension_numbers = #tpu.dot_dimension_numbers<[1], [0], [0], [1], [0, 0, 1, 1], [], []>} : vector<32x64xf32>, vector<64x256xf32>, vector<32x256xf32> -> vector<32x256xf32>
    %293 = vector.broadcast %290 : vector<1x256xf32> to vector<32x256xf32>
    %294 = arith.addf %292, %293 : vector<32x256xf32>
    %295 = vector.extract_strided_slice %294 {offsets = [0, 0], sizes = [32, 128], strides = [1, 1]} : vector<32x256xf32> to vector<32x128xf32>
    %296 = vector.extract_strided_slice %294 {offsets = [0, 128], sizes = [32, 128], strides = [1, 1]} : vector<32x256xf32> to vector<32x128xf32>
    %297 = arith.select %18, %295, %296 : vector<32x128xi1>, vector<32x128xf32>
    %cst_102 = arith.constant 0.000000e+00 : f32
    %298 = vector.broadcast %cst_102 : f32 to vector<4x32xf32>
    %cst_103 = arith.constant 0.000000e+00 : f32
    %299 = vector.broadcast %cst_103 : f32 to vector<4x32xf32>
    %300 = arith.truncf %298 : vector<4x32xf32> to vector<4x32xbf16>
    %cst_104 = arith.constant dense<0.000000e+00> : vector<4x256xf32>
    %301 = tpu.matmul %300, %291, %cst_104 {dimension_numbers = #tpu.dot_dimension_numbers<[1], [0], [0], [1], [0, 0, 1, 1], [], []>} : vector<4x32xbf16>, vector<32x256xbf16>, vector<4x256xf32> -> vector<4x256xf32>
    %302 = vector.extract_strided_slice %297 {offsets = [0, 0], sizes = [4, 128], strides = [1, 1]} : vector<32x128xf32> to vector<4x128xf32>
    %303 = vector.extract_strided_slice %301 {offsets = [0, 0], sizes = [4, 128], strides = [1, 1]} : vector<4x256xf32> to vector<4x128xf32>
    %304 = vector.extract_strided_slice %301 {offsets = [0, 128], sizes = [4, 128], strides = [1, 1]} : vector<4x256xf32> to vector<4x128xf32>
    %305 = arith.select %21, %303, %304 : vector<4x128xi1>, vector<4x128xf32>
    %306 = arith.addf %302, %305 : vector<4x128xf32>
    %cst_105 = arith.constant 5.000000e-01 : f32
    %307 = vector.broadcast %cst_105 : f32 to vector<4x128xf32>
    %308 = arith.mulf %307, %306 : vector<4x128xf32>
    %309 = arith.select %27, %306, %308 : vector<4x128xi1>, vector<4x128xf32>
    %310 = math.tanh %309 : vector<4x128xf32>
    %cst_106 = arith.constant 5.000000e-01 : f32
    %311 = vector.broadcast %cst_106 : f32 to vector<4x128xf32>
    %312 = arith.mulf %311, %310 : vector<4x128xf32>
    %cst_107 = arith.constant 5.000000e-01 : f32
    %313 = vector.broadcast %cst_107 : f32 to vector<4x128xf32>
    %314 = arith.addf %312, %313 : vector<4x128xf32>
    %315 = arith.select %27, %310, %314 : vector<4x128xi1>, vector<4x128xf32>
    %316 = vector.extract_strided_slice %315 {offsets = [0, 0], sizes = [4, 32], strides = [1, 1]} : vector<4x128xf32> to vector<4x32xf32>
    %317 = vector.extract_strided_slice %315 {offsets = [0, 32], sizes = [4, 32], strides = [1, 1]} : vector<4x128xf32> to vector<4x32xf32>
    %318 = vector.extract_strided_slice %315 {offsets = [0, 64], sizes = [4, 32], strides = [1, 1]} : vector<4x128xf32> to vector<4x32xf32>
    %319 = vector.extract_strided_slice %315 {offsets = [0, 96], sizes = [4, 32], strides = [1, 1]} : vector<4x128xf32> to vector<4x32xf32>
    %320 = arith.mulf %317, %299 : vector<4x32xf32>
    %321 = arith.mulf %316, %318 : vector<4x32xf32>
    %322 = arith.addf %320, %321 : vector<4x32xf32>
    %323 = math.tanh %322 : vector<4x32xf32>
    %324 = arith.mulf %319, %323 : vector<4x32xf32>
    %325 = arith.truncf %324 : vector<4x32xf32> to vector<4x32xbf16>
    %cst_108 = arith.constant dense<0.000000e+00> : vector<4x256xf32>
    %326 = tpu.matmul %325, %291, %cst_108 {dimension_numbers = #tpu.dot_dimension_numbers<[1], [0], [0], [1], [0, 0, 1, 1], [], []>} : vector<4x32xbf16>, vector<32x256xbf16>, vector<4x256xf32> -> vector<4x256xf32>
    %327 = vector.extract_strided_slice %297 {offsets = [4, 0], sizes = [4, 128], strides = [1, 1]} : vector<32x128xf32> to vector<4x128xf32>
    %328 = vector.extract_strided_slice %326 {offsets = [0, 0], sizes = [4, 128], strides = [1, 1]} : vector<4x256xf32> to vector<4x128xf32>
    %329 = vector.extract_strided_slice %326 {offsets = [0, 128], sizes = [4, 128], strides = [1, 1]} : vector<4x256xf32> to vector<4x128xf32>
    %330 = arith.select %21, %328, %329 : vector<4x128xi1>, vector<4x128xf32>
    %331 = arith.addf %327, %330 : vector<4x128xf32>
    %cst_109 = arith.constant 5.000000e-01 : f32
    %332 = vector.broadcast %cst_109 : f32 to vector<4x128xf32>
    %333 = arith.mulf %332, %331 : vector<4x128xf32>
    %334 = arith.select %27, %331, %333 : vector<4x128xi1>, vector<4x128xf32>
    %335 = math.tanh %334 : vector<4x128xf32>
    %cst_110 = arith.constant 5.000000e-01 : f32
    %336 = vector.broadcast %cst_110 : f32 to vector<4x128xf32>
    %337 = arith.mulf %336, %335 : vector<4x128xf32>
    %cst_111 = arith.constant 5.000000e-01 : f32
    %338 = vector.broadcast %cst_111 : f32 to vector<4x128xf32>
    %339 = arith.addf %337, %338 : vector<4x128xf32>
    %340 = arith.select %27, %335, %339 : vector<4x128xi1>, vector<4x128xf32>
    %341 = vector.extract_strided_slice %340 {offsets = [0, 0], sizes = [4, 32], strides = [1, 1]} : vector<4x128xf32> to vector<4x32xf32>
    %342 = vector.extract_strided_slice %340 {offsets = [0, 32], sizes = [4, 32], strides = [1, 1]} : vector<4x128xf32> to vector<4x32xf32>
    %343 = vector.extract_strided_slice %340 {offsets = [0, 64], sizes = [4, 32], strides = [1, 1]} : vector<4x128xf32> to vector<4x32xf32>
    %344 = vector.extract_strided_slice %340 {offsets = [0, 96], sizes = [4, 32], strides = [1, 1]} : vector<4x128xf32> to vector<4x32xf32>
    %345 = arith.mulf %342, %322 : vector<4x32xf32>
    %346 = arith.mulf %341, %343 : vector<4x32xf32>
    %347 = arith.addf %345, %346 : vector<4x32xf32>
    %348 = math.tanh %347 : vector<4x32xf32>
    %349 = arith.mulf %344, %348 : vector<4x32xf32>
    %350 = arith.truncf %349 : vector<4x32xf32> to vector<4x32xbf16>
    %cst_112 = arith.constant dense<0.000000e+00> : vector<4x256xf32>
    %351 = tpu.matmul %350, %291, %cst_112 {dimension_numbers = #tpu.dot_dimension_numbers<[1], [0], [0], [1], [0, 0, 1, 1], [], []>} : vector<4x32xbf16>, vector<32x256xbf16>, vector<4x256xf32> -> vector<4x256xf32>
    %352 = vector.extract_strided_slice %297 {offsets = [8, 0], sizes = [4, 128], strides = [1, 1]} : vector<32x128xf32> to vector<4x128xf32>
    %353 = vector.extract_strided_slice %351 {offsets = [0, 0], sizes = [4, 128], strides = [1, 1]} : vector<4x256xf32> to vector<4x128xf32>
    %354 = vector.extract_strided_slice %351 {offsets = [0, 128], sizes = [4, 128], strides = [1, 1]} : vector<4x256xf32> to vector<4x128xf32>
    %355 = arith.select %21, %353, %354 : vector<4x128xi1>, vector<4x128xf32>
    %356 = arith.addf %352, %355 : vector<4x128xf32>
    %cst_113 = arith.constant 5.000000e-01 : f32
    %357 = vector.broadcast %cst_113 : f32 to vector<4x128xf32>
    %358 = arith.mulf %357, %356 : vector<4x128xf32>
    %359 = arith.select %27, %356, %358 : vector<4x128xi1>, vector<4x128xf32>
    %360 = math.tanh %359 : vector<4x128xf32>
    %cst_114 = arith.constant 5.000000e-01 : f32
    %361 = vector.broadcast %cst_114 : f32 to vector<4x128xf32>
    %362 = arith.mulf %361, %360 : vector<4x128xf32>
    %cst_115 = arith.constant 5.000000e-01 : f32
    %363 = vector.broadcast %cst_115 : f32 to vector<4x128xf32>
    %364 = arith.addf %362, %363 : vector<4x128xf32>
    %365 = arith.select %27, %360, %364 : vector<4x128xi1>, vector<4x128xf32>
    %366 = vector.extract_strided_slice %365 {offsets = [0, 0], sizes = [4, 32], strides = [1, 1]} : vector<4x128xf32> to vector<4x32xf32>
    %367 = vector.extract_strided_slice %365 {offsets = [0, 32], sizes = [4, 32], strides = [1, 1]} : vector<4x128xf32> to vector<4x32xf32>
    %368 = vector.extract_strided_slice %365 {offsets = [0, 64], sizes = [4, 32], strides = [1, 1]} : vector<4x128xf32> to vector<4x32xf32>
    %369 = vector.extract_strided_slice %365 {offsets = [0, 96], sizes = [4, 32], strides = [1, 1]} : vector<4x128xf32> to vector<4x32xf32>
    %370 = arith.mulf %367, %347 : vector<4x32xf32>
    %371 = arith.mulf %366, %368 : vector<4x32xf32>
    %372 = arith.addf %370, %371 : vector<4x32xf32>
    %373 = math.tanh %372 : vector<4x32xf32>
    %374 = arith.mulf %369, %373 : vector<4x32xf32>
    %375 = arith.truncf %374 : vector<4x32xf32> to vector<4x32xbf16>
    %cst_116 = arith.constant dense<0.000000e+00> : vector<4x256xf32>
    %376 = tpu.matmul %375, %291, %cst_116 {dimension_numbers = #tpu.dot_dimension_numbers<[1], [0], [0], [1], [0, 0, 1, 1], [], []>} : vector<4x32xbf16>, vector<32x256xbf16>, vector<4x256xf32> -> vector<4x256xf32>
    %377 = vector.extract_strided_slice %297 {offsets = [12, 0], sizes = [4, 128], strides = [1, 1]} : vector<32x128xf32> to vector<4x128xf32>
    %378 = vector.extract_strided_slice %376 {offsets = [0, 0], sizes = [4, 128], strides = [1, 1]} : vector<4x256xf32> to vector<4x128xf32>
    %379 = vector.extract_strided_slice %376 {offsets = [0, 128], sizes = [4, 128], strides = [1, 1]} : vector<4x256xf32> to vector<4x128xf32>
    %380 = arith.select %21, %378, %379 : vector<4x128xi1>, vector<4x128xf32>
    %381 = arith.addf %377, %380 : vector<4x128xf32>
    %cst_117 = arith.constant 5.000000e-01 : f32
    %382 = vector.broadcast %cst_117 : f32 to vector<4x128xf32>
    %383 = arith.mulf %382, %381 : vector<4x128xf32>
    %384 = arith.select %27, %381, %383 : vector<4x128xi1>, vector<4x128xf32>
    %385 = math.tanh %384 : vector<4x128xf32>
    %cst_118 = arith.constant 5.000000e-01 : f32
    %386 = vector.broadcast %cst_118 : f32 to vector<4x128xf32>
    %387 = arith.mulf %386, %385 : vector<4x128xf32>
    %cst_119 = arith.constant 5.000000e-01 : f32
    %388 = vector.broadcast %cst_119 : f32 to vector<4x128xf32>
    %389 = arith.addf %387, %388 : vector<4x128xf32>
    %390 = arith.select %27, %385, %389 : vector<4x128xi1>, vector<4x128xf32>
    %391 = vector.extract_strided_slice %390 {offsets = [0, 0], sizes = [4, 32], strides = [1, 1]} : vector<4x128xf32> to vector<4x32xf32>
    %392 = vector.extract_strided_slice %390 {offsets = [0, 32], sizes = [4, 32], strides = [1, 1]} : vector<4x128xf32> to vector<4x32xf32>
    %393 = vector.extract_strided_slice %390 {offsets = [0, 64], sizes = [4, 32], strides = [1, 1]} : vector<4x128xf32> to vector<4x32xf32>
    %394 = vector.extract_strided_slice %390 {offsets = [0, 96], sizes = [4, 32], strides = [1, 1]} : vector<4x128xf32> to vector<4x32xf32>
    %395 = arith.mulf %392, %372 : vector<4x32xf32>
    %396 = arith.mulf %391, %393 : vector<4x32xf32>
    %397 = arith.addf %395, %396 : vector<4x32xf32>
    %398 = math.tanh %397 : vector<4x32xf32>
    %399 = arith.mulf %394, %398 : vector<4x32xf32>
    %400 = arith.truncf %399 : vector<4x32xf32> to vector<4x32xbf16>
    %cst_120 = arith.constant dense<0.000000e+00> : vector<4x256xf32>
    %401 = tpu.matmul %400, %291, %cst_120 {dimension_numbers = #tpu.dot_dimension_numbers<[1], [0], [0], [1], [0, 0, 1, 1], [], []>} : vector<4x32xbf16>, vector<32x256xbf16>, vector<4x256xf32> -> vector<4x256xf32>
    %402 = vector.extract_strided_slice %297 {offsets = [16, 0], sizes = [4, 128], strides = [1, 1]} : vector<32x128xf32> to vector<4x128xf32>
    %403 = vector.extract_strided_slice %401 {offsets = [0, 0], sizes = [4, 128], strides = [1, 1]} : vector<4x256xf32> to vector<4x128xf32>
    %404 = vector.extract_strided_slice %401 {offsets = [0, 128], sizes = [4, 128], strides = [1, 1]} : vector<4x256xf32> to vector<4x128xf32>
    %405 = arith.select %21, %403, %404 : vector<4x128xi1>, vector<4x128xf32>
    %406 = arith.addf %402, %405 : vector<4x128xf32>
    %cst_121 = arith.constant 5.000000e-01 : f32
    %407 = vector.broadcast %cst_121 : f32 to vector<4x128xf32>
    %408 = arith.mulf %407, %406 : vector<4x128xf32>
    %409 = arith.select %27, %406, %408 : vector<4x128xi1>, vector<4x128xf32>
    %410 = math.tanh %409 : vector<4x128xf32>
    %cst_122 = arith.constant 5.000000e-01 : f32
    %411 = vector.broadcast %cst_122 : f32 to vector<4x128xf32>
    %412 = arith.mulf %411, %410 : vector<4x128xf32>
    %cst_123 = arith.constant 5.000000e-01 : f32
    %413 = vector.broadcast %cst_123 : f32 to vector<4x128xf32>
    %414 = arith.addf %412, %413 : vector<4x128xf32>
    %415 = arith.select %27, %410, %414 : vector<4x128xi1>, vector<4x128xf32>
    %416 = vector.extract_strided_slice %415 {offsets = [0, 0], sizes = [4, 32], strides = [1, 1]} : vector<4x128xf32> to vector<4x32xf32>
    %417 = vector.extract_strided_slice %415 {offsets = [0, 32], sizes = [4, 32], strides = [1, 1]} : vector<4x128xf32> to vector<4x32xf32>
    %418 = vector.extract_strided_slice %415 {offsets = [0, 64], sizes = [4, 32], strides = [1, 1]} : vector<4x128xf32> to vector<4x32xf32>
    %419 = vector.extract_strided_slice %415 {offsets = [0, 96], sizes = [4, 32], strides = [1, 1]} : vector<4x128xf32> to vector<4x32xf32>
    %420 = arith.mulf %417, %397 : vector<4x32xf32>
    %421 = arith.mulf %416, %418 : vector<4x32xf32>
    %422 = arith.addf %420, %421 : vector<4x32xf32>
    %423 = math.tanh %422 : vector<4x32xf32>
    %424 = arith.mulf %419, %423 : vector<4x32xf32>
    %425 = arith.truncf %424 : vector<4x32xf32> to vector<4x32xbf16>
    %cst_124 = arith.constant dense<0.000000e+00> : vector<4x256xf32>
    %426 = tpu.matmul %425, %291, %cst_124 {dimension_numbers = #tpu.dot_dimension_numbers<[1], [0], [0], [1], [0, 0, 1, 1], [], []>} : vector<4x32xbf16>, vector<32x256xbf16>, vector<4x256xf32> -> vector<4x256xf32>
    %427 = vector.extract_strided_slice %297 {offsets = [20, 0], sizes = [4, 128], strides = [1, 1]} : vector<32x128xf32> to vector<4x128xf32>
    %428 = vector.extract_strided_slice %426 {offsets = [0, 0], sizes = [4, 128], strides = [1, 1]} : vector<4x256xf32> to vector<4x128xf32>
    %429 = vector.extract_strided_slice %426 {offsets = [0, 128], sizes = [4, 128], strides = [1, 1]} : vector<4x256xf32> to vector<4x128xf32>
    %430 = arith.select %21, %428, %429 : vector<4x128xi1>, vector<4x128xf32>
    %431 = arith.addf %427, %430 : vector<4x128xf32>
    %cst_125 = arith.constant 5.000000e-01 : f32
    %432 = vector.broadcast %cst_125 : f32 to vector<4x128xf32>
    %433 = arith.mulf %432, %431 : vector<4x128xf32>
    %434 = arith.select %27, %431, %433 : vector<4x128xi1>, vector<4x128xf32>
    %435 = math.tanh %434 : vector<4x128xf32>
    %cst_126 = arith.constant 5.000000e-01 : f32
    %436 = vector.broadcast %cst_126 : f32 to vector<4x128xf32>
    %437 = arith.mulf %436, %435 : vector<4x128xf32>
    %cst_127 = arith.constant 5.000000e-01 : f32
    %438 = vector.broadcast %cst_127 : f32 to vector<4x128xf32>
    %439 = arith.addf %437, %438 : vector<4x128xf32>
    %440 = arith.select %27, %435, %439 : vector<4x128xi1>, vector<4x128xf32>
    %441 = vector.extract_strided_slice %440 {offsets = [0, 0], sizes = [4, 32], strides = [1, 1]} : vector<4x128xf32> to vector<4x32xf32>
    %442 = vector.extract_strided_slice %440 {offsets = [0, 32], sizes = [4, 32], strides = [1, 1]} : vector<4x128xf32> to vector<4x32xf32>
    %443 = vector.extract_strided_slice %440 {offsets = [0, 64], sizes = [4, 32], strides = [1, 1]} : vector<4x128xf32> to vector<4x32xf32>
    %444 = vector.extract_strided_slice %440 {offsets = [0, 96], sizes = [4, 32], strides = [1, 1]} : vector<4x128xf32> to vector<4x32xf32>
    %445 = arith.mulf %442, %422 : vector<4x32xf32>
    %446 = arith.mulf %441, %443 : vector<4x32xf32>
    %447 = arith.addf %445, %446 : vector<4x32xf32>
    %448 = math.tanh %447 : vector<4x32xf32>
    %449 = arith.mulf %444, %448 : vector<4x32xf32>
    %450 = arith.truncf %449 : vector<4x32xf32> to vector<4x32xbf16>
    %cst_128 = arith.constant dense<0.000000e+00> : vector<4x256xf32>
    %451 = tpu.matmul %450, %291, %cst_128 {dimension_numbers = #tpu.dot_dimension_numbers<[1], [0], [0], [1], [0, 0, 1, 1], [], []>} : vector<4x32xbf16>, vector<32x256xbf16>, vector<4x256xf32> -> vector<4x256xf32>
    %452 = vector.extract_strided_slice %297 {offsets = [24, 0], sizes = [4, 128], strides = [1, 1]} : vector<32x128xf32> to vector<4x128xf32>
    %453 = vector.extract_strided_slice %451 {offsets = [0, 0], sizes = [4, 128], strides = [1, 1]} : vector<4x256xf32> to vector<4x128xf32>
    %454 = vector.extract_strided_slice %451 {offsets = [0, 128], sizes = [4, 128], strides = [1, 1]} : vector<4x256xf32> to vector<4x128xf32>
    %455 = arith.select %21, %453, %454 : vector<4x128xi1>, vector<4x128xf32>
    %456 = arith.addf %452, %455 : vector<4x128xf32>
    %cst_129 = arith.constant 5.000000e-01 : f32
    %457 = vector.broadcast %cst_129 : f32 to vector<4x128xf32>
    %458 = arith.mulf %457, %456 : vector<4x128xf32>
    %459 = arith.select %27, %456, %458 : vector<4x128xi1>, vector<4x128xf32>
    %460 = math.tanh %459 : vector<4x128xf32>
    %cst_130 = arith.constant 5.000000e-01 : f32
    %461 = vector.broadcast %cst_130 : f32 to vector<4x128xf32>
    %462 = arith.mulf %461, %460 : vector<4x128xf32>
    %cst_131 = arith.constant 5.000000e-01 : f32
    %463 = vector.broadcast %cst_131 : f32 to vector<4x128xf32>
    %464 = arith.addf %462, %463 : vector<4x128xf32>
    %465 = arith.select %27, %460, %464 : vector<4x128xi1>, vector<4x128xf32>
    %466 = vector.extract_strided_slice %465 {offsets = [0, 0], sizes = [4, 32], strides = [1, 1]} : vector<4x128xf32> to vector<4x32xf32>
    %467 = vector.extract_strided_slice %465 {offsets = [0, 32], sizes = [4, 32], strides = [1, 1]} : vector<4x128xf32> to vector<4x32xf32>
    %468 = vector.extract_strided_slice %465 {offsets = [0, 64], sizes = [4, 32], strides = [1, 1]} : vector<4x128xf32> to vector<4x32xf32>
    %469 = vector.extract_strided_slice %465 {offsets = [0, 96], sizes = [4, 32], strides = [1, 1]} : vector<4x128xf32> to vector<4x32xf32>
    %470 = arith.mulf %467, %447 : vector<4x32xf32>
    %471 = arith.mulf %466, %468 : vector<4x32xf32>
    %472 = arith.addf %470, %471 : vector<4x32xf32>
    %473 = math.tanh %472 : vector<4x32xf32>
    %474 = arith.mulf %469, %473 : vector<4x32xf32>
    %475 = arith.truncf %474 : vector<4x32xf32> to vector<4x32xbf16>
    %cst_132 = arith.constant dense<0.000000e+00> : vector<4x256xf32>
    %476 = tpu.matmul %475, %291, %cst_132 {dimension_numbers = #tpu.dot_dimension_numbers<[1], [0], [0], [1], [0, 0, 1, 1], [], []>} : vector<4x32xbf16>, vector<32x256xbf16>, vector<4x256xf32> -> vector<4x256xf32>
    %477 = vector.extract_strided_slice %297 {offsets = [28, 0], sizes = [4, 128], strides = [1, 1]} : vector<32x128xf32> to vector<4x128xf32>
    %478 = vector.extract_strided_slice %476 {offsets = [0, 0], sizes = [4, 128], strides = [1, 1]} : vector<4x256xf32> to vector<4x128xf32>
    %479 = vector.extract_strided_slice %476 {offsets = [0, 128], sizes = [4, 128], strides = [1, 1]} : vector<4x256xf32> to vector<4x128xf32>
    %480 = arith.select %21, %478, %479 : vector<4x128xi1>, vector<4x128xf32>
    %481 = arith.addf %477, %480 : vector<4x128xf32>
    %cst_133 = arith.constant 5.000000e-01 : f32
    %482 = vector.broadcast %cst_133 : f32 to vector<4x128xf32>
    %483 = arith.mulf %482, %481 : vector<4x128xf32>
    %484 = arith.select %27, %481, %483 : vector<4x128xi1>, vector<4x128xf32>
    %485 = math.tanh %484 : vector<4x128xf32>
    %cst_134 = arith.constant 5.000000e-01 : f32
    %486 = vector.broadcast %cst_134 : f32 to vector<4x128xf32>
    %487 = arith.mulf %486, %485 : vector<4x128xf32>
    %cst_135 = arith.constant 5.000000e-01 : f32
    %488 = vector.broadcast %cst_135 : f32 to vector<4x128xf32>
    %489 = arith.addf %487, %488 : vector<4x128xf32>
    %490 = arith.select %27, %485, %489 : vector<4x128xi1>, vector<4x128xf32>
    %491 = vector.extract_strided_slice %490 {offsets = [0, 0], sizes = [4, 32], strides = [1, 1]} : vector<4x128xf32> to vector<4x32xf32>
    %492 = vector.extract_strided_slice %490 {offsets = [0, 32], sizes = [4, 32], strides = [1, 1]} : vector<4x128xf32> to vector<4x32xf32>
    %493 = vector.extract_strided_slice %490 {offsets = [0, 64], sizes = [4, 32], strides = [1, 1]} : vector<4x128xf32> to vector<4x32xf32>
    %494 = vector.extract_strided_slice %490 {offsets = [0, 96], sizes = [4, 32], strides = [1, 1]} : vector<4x128xf32> to vector<4x32xf32>
    %495 = arith.mulf %492, %472 : vector<4x32xf32>
    %496 = arith.mulf %491, %493 : vector<4x32xf32>
    %497 = arith.addf %495, %496 : vector<4x32xf32>
    %498 = math.tanh %497 : vector<4x32xf32>
    %499 = arith.mulf %494, %498 : vector<4x32xf32>
    %500 = vector.extract_strided_slice %499 {offsets = [0, 0], sizes = [2, 32], strides = [1, 1]} : vector<4x32xf32> to vector<2x32xf32>
    %501 = vector.extract_strided_slice %499 {offsets = [2, 0], sizes = [2, 32], strides = [1, 1]} : vector<4x32xf32> to vector<2x32xf32>
    %502 = tpu.concatenate %500, %501 in 1 : vector<2x32xf32>, vector<2x32xf32> -> vector<2x64xf32>
    %c0_136 = arith.constant 0 : index
    %c0_137 = arith.constant 0 : index
    %503 = vector.load %arg7[%c0_136, %c0_137] : memref<64x8xf32, #tpu.memory_space<vmem>>, vector<64x8xf32>
    %cst_138 = arith.constant dense<0.000000e+00> : vector<2x8xf32>
    %504 = tpu.matmul %502, %503, %cst_138 {dimension_numbers = #tpu.dot_dimension_numbers<[1], [0], [0], [1], [0, 0, 1, 1], [], []>} : vector<2x64xf32>, vector<64x8xf32>, vector<2x8xf32> -> vector<2x8xf32>
    %c0_139 = arith.constant 0 : index
    %c0_140 = arith.constant 0 : index
    %505 = vector.load %arg8[%c0_139, %c0_140] : memref<1x8xf32, #tpu.memory_space<vmem>>, vector<1x8xf32>
    %506 = vector.broadcast %505 : vector<1x8xf32> to vector<2x8xf32>
    %507 = arith.addf %504, %506 : vector<2x8xf32>
    %c0_141 = arith.constant 0 : index
    %c0_142 = arith.constant 0 : index
    %508 = vector.load %arg9[%c0_141, %c0_142] : memref<2x8xf32, #tpu.memory_space<vmem>>, vector<2x8xf32>
    tpu.vector_store %arg9[%c0_141, %c0_142], %507 {strides = array<i32>} : memref<2x8xf32, #tpu.memory_space<vmem>>, vector<2x8xf32>,
    return
  }
}

</mosaic_0001>

<llo_original>
// kernel: lstm_model_forward.1
$region0: #{lstm_model_forward.1}
  #allocation0 [shape = 'u32[]', space=smem, size = 0x4, offset = 0x4, fixed_abs, tag = 'smem constant byte address 0x4 - core index']
  #allocation1 [shape = 'u32[72,128]{1,0:T(1,128)}', space=vmem, size = 0x9000, scoped, tag = 'internal scratch']
  #allocation2 [shape = 'f32[32,64]{1,0:T(8,128)}', space=vmem, size = 0x4000, scoped, tag = 'scratch operand']
  %s0 = inlined_call_operand.vmem [shape: f32[32,16], index: 0, kind: input, shape index: {}]
  %s1 = inlined_call_operand.vmem [shape: f32[16,256], index: 1, kind: input, shape index: {}]
  %s2 = inlined_call_operand.vmem [shape: f32[1,256], index: 2, kind: input, shape index: {}]
  %s3 = inlined_call_operand.vmem [shape: bf16[32,256], index: 3, kind: input, shape index: {}]
  %s4 = inlined_call_operand.vmem [shape: f32[64,256], index: 4, kind: input, shape index: {}]
  %s5 = inlined_call_operand.vmem [shape: f32[1,256], index: 5, kind: input, shape index: {}]
  %s6 = inlined_call_operand.hbm [shape: bf16[32,256], index: 6, kind: input, shape index: {}]
  %s7 = inlined_call_operand.vmem [shape: f32[64,8], index: 7, kind: input, shape index: {}]
  %s8 = inlined_call_operand.vmem [shape: f32[1,8], index: 8, kind: input, shape index: {}]
  %s9 = inlined_call_operand.hbm [shape: f32[2,8], index: 9, kind: output, shape index: {}]
  %s10 = sld [smem:[#allocation0]]
  $region50: #{lstm_model_forward.1} parent=0
    _
  %s12 = ssub.s32 1, %s10
  %s13 = scalar_select 0, %s12, %s10
  $region1: #{lstm_model_forward.1} parent=0
    #allocation3 [shape = 'u8[16384]{0}', space=vmem, size = 0x4000, scoped, tag = 'input window, operand 6, single buffered']
    #allocation4 [shape = 's32[1]{0}', space=sflag, size = 0x4, scoped, tag = 'scoped memory for lstm_model_forward.1']
    #allocation5 [shape = 's32[1]{0}', space=sflag, size = 0x4, scoped, tag = 'scoped memory for lstm_model_forward.1']
    #allocation6 [shape = 'u8[1024]{0}', space=vmem, size = 0x400, scoped, tag = 'output window, operand 0, single buffered']
    %14 = vsyncpa [#allocation4], 0
    %15 = vsyncpa [#allocation5], 0
    // Predicated region
    $region2: #{lstm_model_forward.1} parent=1 // pred_check
      _
    $region3: #{lstm_model_forward.1} parent=1 // pred_check_branch
      %17 = sbr.rel (0) target = $region5
    $region4: #{lstm_model_forward.1} parent=1 // pred_region
      _
    $region5: #{lstm_model_forward.1} parent=1 // pred_fallthru
      _
    // Predicated region
    $region6: #{lstm_model_forward.1} parent=1 // pred_check
      _
    $region7: #{lstm_model_forward.1} parent=1 // pred_check_branch
      %19 = sbr.rel (0) target = $region9
    $region8: #{lstm_model_forward.1} parent=1 // pred_region
      _
    $region9: #{lstm_model_forward.1} parent=1 // pred_fallthru
      _
    // Predicated region
    $region10: #{lstm_model_forward.1} parent=1 // pred_check
      _
    $region11: #{lstm_model_forward.1} parent=1 // pred_check_branch
      %21 = sbr.rel (0) target = $region13
    $region12: #{lstm_model_forward.1} parent=1 // pred_region
      _
    $region13: #{lstm_model_forward.1} parent=1 // pred_fallthru
      _
    // Predicated region
    $region14: #{lstm_model_forward.1} parent=1 // pred_check
      _
    $region15: #{lstm_model_forward.1} parent=1 // pred_check_branch
      %23 = sbr.rel (0) target = $region17
    $region16: #{lstm_model_forward.1} parent=1 // pred_region
      _
    $region17: #{lstm_model_forward.1} parent=1 // pred_fallthru
      _
    // Predicated region
    $region18: #{lstm_model_forward.1} parent=1 // pred_check
      _
    $region19: #{lstm_model_forward.1} parent=1 // pred_check_branch
      %25 = sbr.rel (0) target = $region21
    $region20: #{lstm_model_forward.1} parent=1 // pred_region
      _
    $region21: #{lstm_model_forward.1} parent=1 // pred_fallthru
      _
    // Predicated region
    $region22: #{lstm_model_forward.1} parent=1 // pred_check
      _
    $region23: #{lstm_model_forward.1} parent=1 // pred_check_branch
      %27 = sbr.rel (0) target = $region25
    $region24: #{lstm_model_forward.1} parent=1 // pred_region
      _
    $region25: #{lstm_model_forward.1} parent=1 // pred_fallthru
      _
    // Predicated region
    $region26: #{lstm_model_forward.1} parent=1 // pred_check
      _
    $region27: #{lstm_model_forward.1} parent=1 // pred_check_branch
      %29 = sbr.rel (0) target = $region29
    $region28: #{lstm_model_forward.1} parent=1 // pred_region
      %31 = vsyncadd [#allocation4], 0
      %s32 = sshll.u32 %s6, 4
      %s33 = int_to_ptr.hbm [resolvable:$true] %s32
      %s34 = sshll.u32 [#allocation3], 4
      %s35 = int_to_ptr.vmem [resolvable:$true] %s34
      %40 = dma.hbm_to_vmem [thread:$0]  %s33, 512, %s35, [#allocation4], 128, 128, 8
    $region29: #{lstm_model_forward.1} parent=1 // pred_fallthru
      _
    // Predicated region
    $region30: #{lstm_model_forward.1} parent=1 // pred_check
      _
    $region31: #{lstm_model_forward.1} parent=1 // pred_check_branch
      %42 = sbr.rel (0) target = $region33
    $region32: #{lstm_model_forward.1} parent=1 // pred_region
      _
    $region33: #{lstm_model_forward.1} parent=1 // pred_fallthru
      _
    // Predicated region
    $region34: #{lstm_model_forward.1} parent=1 // pred_check
      _
    $region35: #{lstm_model_forward.1} parent=1 // pred_check_branch
      %44 = sbr.rel (0) target = $region37
    $region36: #{lstm_model_forward.1} parent=1 // pred_region
      _
    $region37: #{lstm_model_forward.1} parent=1 // pred_fallthru
      _
    // Predicated region
    $region38: #{lstm_model_forward.1} parent=1 // pred_check
      _
    $region39: #{lstm_model_forward.1} parent=1 // pred_check_branch
      %46 = sbr.rel (0) target = $region41
    $region40: #{lstm_model_forward.1} parent=1 // pred_region
      %48 = dma.done [#allocation4], 512
    $region41: #{lstm_model_forward.1} parent=1 // pred_fallthru
      _
    %v50 = vlaneseq
    %v51 = vshrl.u32 %v50, 7
    %v52 = vadd.s32 %v51, 8
    %v53 = vadd.s32 %v51, 16
    %v54 = vadd.s32 %v51, 24
    %vm55 = vcmp.lt.s32.totalorder %v51, 0
    %v56 = vsub.s32 0, %v51
    %v57 = vsel %vm55, %v56, %v51
    %v58 = vshrl.u32 %v57, 2
    %v59 = vand.u32 %v57, 3
    %v60 = vsub.s32 0, %v59
    %v61 = vsel %vm55, %v60, %v59
    %vm62 = vcmp.lt.s32.totalorder %v52, 0
    %v63 = vsub.s32 0, %v52
    %v64 = vsel %vm62, %v63, %v52
    %v65 = vshrl.u32 %v64, 2
    %v66 = vand.u32 %v64, 3
    %v67 = vsub.s32 0, %v66
    %v68 = vsel %vm62, %v67, %v66
    %vm69 = vcmp.lt.s32.totalorder %v53, 0
    %v70 = vsub.s32 0, %v53
    %v71 = vsel %vm69, %v70, %v53
    %v72 = vshrl.u32 %v71, 2
    %v73 = vand.u32 %v71, 3
    %v74 = vsub.s32 0, %v73
    %v75 = vsel %vm69, %v74, %v73
    %vm76 = vcmp.lt.s32.totalorder %v54, 0
    %v77 = vsub.s32 0, %v54
    %v78 = vsel %vm76, %v77, %v54
    %v79 = vshrl.u32 %v78, 2
    %v80 = vand.u32 %v78, 3
    %v81 = vsub.s32 0, %v80
    %v82 = vsel %vm76, %v81, %v80
    %vm83 = vcmp.ne.s32.totalorder %v61, 0
    %vm84 = vcmp.ne.s32.totalorder %v68, 0
    %vm85 = vcmp.ne.s32.totalorder %v75, 0
    %vm86 = vcmp.ne.s32.totalorder %v82, 0
    %vm87 = vcmp.lt.s32.totalorder %v61, 0
    %vm88 = vcmp.lt.s32.totalorder %v68, 0
    %vm89 = vcmp.lt.s32.totalorder %v75, 0
    %vm90 = vcmp.lt.s32.totalorder %v82, 0
    %vm91 = vmand %vm87, %vm83
    %vm92 = vmand %vm88, %vm84
    %vm93 = vmand %vm89, %vm85
    %vm94 = vmand %vm90, %vm86
    %v95 = vadd.s32 %v61, 4
    %v96 = vadd.s32 %v68, 4
    %v97 = vadd.s32 %v75, 4
    %v98 = vadd.s32 %v82, 4
    %v99 = vsel %vm91, %v95, %v61
    %v100 = vsel %vm92, %v96, %v68
    %v101 = vsel %vm93, %v97, %v75
    %v102 = vsel %vm94, %v98, %v82
    %vm103 = vcmp.lt.s32.totalorder %v99, 2
    %vm104 = vcmp.lt.s32.totalorder %v100, 2
    %vm105 = vcmp.lt.s32.totalorder %v101, 2
    %vm106 = vcmp.lt.s32.totalorder %v102, 2
    %vm107 = vcmp.lt.s32.totalorder %v51, 2
    %v108 = vlaneseq
    %v109 = vand.u32 %v108, 127
    %vm110 = vcmp.ge.s32.totalorder %v109, 64
    %vm111 = vcmp.lt.s32.totalorder %v109, 96
    %vm112 = vmand %vm110, %vm111
    %v113 = vld [vmem:[%s0] sm:$0xff]
    %v114 = vld [vmem:[%s0 + $0x8] sm:$0xff]
    %v115 = vld [vmem:[%s0 + $0x10] sm:$0xff]
    %v116 = vld [vmem:[%s0 + $0x18] sm:$0xff]
    %v117 = vld [vmem:[%s1] sm:$0xff]
    %v118 = vld [vmem:[%s1 + $0x8] sm:$0xff]
    %v119 = vld [vmem:[%s1 + $0x10] sm:$0xff]
    %v120 = vld [vmem:[%s1 + $0x18] sm:$0xff]
    %v121 = vld [vmem:[%s2] sm:$0x3]
    %v122 = vld [vmem:[%s3] sm:$0xff]
    %v123 = vld [vmem:[%s3 + $0x8] sm:$0xff]
    %v124 = vld [vmem:[%s3 + $0x10] sm:$0xff]
    %v125 = vld [vmem:[%s3 + $0x18] sm:$0xff]
    %v127 = vperm.slane %v121, 0
    %v128 = vperm.slane %v121, 1
    %vm131 = vcmask 130048
    %v133 = vsel %vm131, %v113, 0
    %v136 = vsel %vm131, %v114, 0
    %v139 = vsel %vm131, %v115, 0
    %v142 = vsel %vm131, %v116, 0
    %144 = vmatpush.msra.mxu0 0.0
    %145 = vmatpush.msra.mxu0 0.0
    %146 = vmatpush.msra.mxu0 0.0
    %147 = vmatpush.msra.mxu0 0.0
    %148 = vmatpush.msra.mxu0 0.0
    %149 = vmatpush.msra.mxu0 0.0
    %150 = vmatpush.msra.mxu0 0.0
    %151 = vmatpush.msra.mxu0 0.0
    %152 = vmatpush.msra.mxu0 0.0
    %153 = vmatpush.msra.mxu0 0.0
    %154 = vmatpush.msra.mxu0 0.0
    %155 = vmatpush.msra.mxu0 0.0
    %156 = vmatpush.msra.mxu0 0.0
    %157 = vmatpush.msra.mxu0 0.0
    %158 = vmatpush.msra.mxu0 %v119
    %159 = vmatpush.msra.mxu0 %v117
    %160 = vmatmul.f32.gmra.mxu0 %v133
    %v161 = vpop.f32.mrf.mxu0
    %v162 = vadd.f32 %v127, %v161
    %163 = vmatmul.f32.gmra.mxu0 %v136
    %v164 = vpop.f32.mrf.mxu0
    %v165 = vadd.f32 %v127, %v164
    %166 = vmatmul.f32.gmra.mxu0 %v139
    %v167 = vpop.f32.mrf.mxu0
    %v168 = vadd.f32 %v127, %v167
    %169 = vmatmul.f32.gmra.mxu0 %v142
    %v170 = vpop.f32.mrf.mxu0
    %v171 = vadd.f32 %v127, %v170
    %172 = vdwg.mxu0
    %173 = vmatpush.msra.mxu0 0.0
    %174 = vmatpush.msra.mxu0 0.0
    %175 = vmatpush.msra.mxu0 0.0
    %176 = vmatpush.msra.mxu0 0.0
    %177 = vmatpush.msra.mxu0 0.0
    %178 = vmatpush.msra.mxu0 0.0
    %179 = vmatpush.msra.mxu0 0.0
    %180 = vmatpush.msra.mxu0 0.0
    %181 = vmatpush.msra.mxu0 0.0
    %182 = vmatpush.msra.mxu0 0.0
    %183 = vmatpush.msra.mxu0 0.0
    %184 = vmatpush.msra.mxu0 0.0
    %185 = vmatpush.msra.mxu0 0.0
    %186 = vmatpush.msra.mxu0 0.0
    %187 = vmatpush.msra.mxu0 %v120
    %188 = vmatpush.msra.mxu0 %v118
    %189 = vmatmul.f32.gmra.mxu0 %v133
    %v190 = vpop.f32.mrf.mxu0
    %v191 = vadd.f32 %v128, %v190
    %192 = vmatmul.f32.gmra.mxu0 %v136
    %v193 = vpop.f32.mrf.mxu0
    %v194 = vadd.f32 %v128, %v193
    %195 = vmatmul.f32.gmra.mxu0 %v139
    %v196 = vpop.f32.mrf.mxu0
    %v197 = vadd.f32 %v128, %v196
    %198 = vmatmul.f32.gmra.mxu0 %v142
    %v199 = vpop.f32.mrf.mxu0
    %v200 = vadd.f32 %v128, %v199
    %201 = vdwg.mxu0
    %v202 = vsel %vm103, %v162, %v191
    %v203 = vsel %vm104, %v165, %v194
    %v204 = vsel %vm105, %v168, %v197
    %v205 = vsel %vm106, %v171, %v200
    %v210 = vunpack.c.l.b16 %v122
    %v211 = vunpack.c.h.b16 %v122
    %v212 = vunpack.c.l.b16 %v123
    %v213 = vunpack.c.h.b16 %v123
    %v214 = vunpack.c.l.b16 %v124
    %v215 = vunpack.c.h.b16 %v124
    %v216 = vunpack.c.l.b16 %v125
    %v217 = vunpack.c.h.b16 %v125
    %v218 = vpack.c.b16 %v212, %v210
    %v219 = vpack.c.b16 %v213, %v211
    %v220 = vpack.c.b16 %v216, %v214
    %v221 = vpack.c.b16 %v217, %v215
    %vm226 = vcmask 261120
    %v228 = vsel %vm226, 0, 0
    %230 = vmatpush.bf16.msra.mxu0 0
    %231 = vmatpush.bf16.msra.mxu0 0
    %232 = vmatpush.bf16.msra.mxu0 0
    %233 = vmatpush.bf16.msra.mxu0 0
    %234 = vmatpush.bf16.msra.mxu0 0
    %235 = vmatpush.bf16.msra.mxu0 0
    %236 = vmatpush.bf16.msra.mxu0 %v220
    %237 = vmatpush.bf16.msra.mxu0 %v218
    %238 = vmatmul.bf16.gmra.mxu0 %v228
    %v239 = vpop.f32.mrf.mxu0
    %v240 = vadd.f32 0.0, %v239
    %v241 = vpop.f32.mrf.mxu0
    %242 = vdwg.mxu0
    %243 = vmatpush.bf16.msra.mxu0 0
    %244 = vmatpush.bf16.msra.mxu0 0
    %245 = vmatpush.bf16.msra.mxu0 0
    %246 = vmatpush.bf16.msra.mxu0 0
    %247 = vmatpush.bf16.msra.mxu0 0
    %248 = vmatpush.bf16.msra.mxu0 0
    %249 = vmatpush.bf16.msra.mxu0 %v221
    %250 = vmatpush.bf16.msra.mxu0 %v219
    %251 = vmatmul.bf16.gmra.mxu0 %v228
    %v252 = vpop.f32.mrf.mxu0
    %v253 = vadd.f32 0.0, %v252
    %v254 = vpop.f32.mrf.mxu0
    %255 = vdwg.mxu0
    %v256 = vsel %vm107, %v240, %v253
    %v257 = vadd.f32 %v202, %v256
    %v258 = vmul.f32 %v257, 0.5
    %v259 = vsel %vm112, %v257, %v258
    %v260 = vtanh.pop %v259
    %v261 = vmul.f32 %v260, 0.5
    %v262 = vadd.f32 %v261, 0.5
    %v263 = vsel %vm112, %v260, %v262
    %v264 = vmul.f32 %v263, 0.0
    %266 = vrot.lane.b32.xlu0 %v263, 64
    %v267 = vpop.permute.xlu0 %266
    %v269 = vmul.f32 %v263, %v267
    %271 = vrot.lane.b32.xlu0 %v269, 32
    %v272 = vpop.permute.xlu0 %271
    %v274 = vadd.f32 %v264, %v272
    %v275 = vtanh.pop %v274
    %277 = vrot.lane.b32.xlu0 %v275, 64
    %v278 = vpop.permute.xlu0 %277
    %v280 = vmul.f32 %v263, %v278
    %282 = vrot.lane.b32.xlu0 %v280, 32
    %v283 = vpop.permute.xlu0 %282
    %vm285 = vcmask 254976
    %286 = vst.msk [vmem:[#allocation2] sm:$0x3] %vm285, %v283
    %287 = vrot.lane.b32.xlu0 %v280, 64
    %v288 = vpop.permute.xlu0 %287
    %vm290 = vcmask 519426
    %291 = vst.msk [vmem:[#allocation2] sm:$0xc] %vm290, %v288
    %292 = vst.msk [vmem:[#allocation2 + $0x1a] sm:$0xc] %vm290, %v288
    %293 = vst.msk [vmem:[#allocation2 + $0x1e] sm:$0x3] %vm285, %v283
    %v294 = vpack.c.bf16 %v280, %v280
    %296 = vrot.lane.b32.xlu0 %v294, 32
    %v297 = vpop.permute.xlu0 %296
    %v299 = vsel %vm226, %v297, 0
    %301 = vmatpush.bf16.msra.mxu0 0
    %302 = vmatpush.bf16.msra.mxu0 0
    %303 = vmatpush.bf16.msra.mxu0 0
    %304 = vmatpush.bf16.msra.mxu0 0
    %305 = vmatpush.bf16.msra.mxu0 0
    %306 = vmatpush.bf16.msra.mxu0 0
    %307 = vmatpush.bf16.msra.mxu0 %v220
    %308 = vmatpush.bf16.msra.mxu0 %v218
    %309 = vmatmul.bf16.gmra.mxu0 %v299
    %v310 = vpop.f32.mrf.mxu0
    %v311 = vadd.f32 0.0, %v310
    %v312 = vpop.f32.mrf.mxu0
    %313 = vdwg.mxu0
    %314 = vmatpush.bf16.msra.mxu0 0
    %315 = vmatpush.bf16.msra.mxu0 0
    %316 = vmatpush.bf16.msra.mxu0 0
    %317 = vmatpush.bf16.msra.mxu0 0
    %318 = vmatpush.bf16.msra.mxu0 0
    %319 = vmatpush.bf16.msra.mxu0 0
    %320 = vmatpush.bf16.msra.mxu0 %v221
    %321 = vmatpush.bf16.msra.mxu0 %v219
    %322 = vmatmul.bf16.gmra.mxu0 %v299
    %v323 = vpop.f32.mrf.mxu0
    %v324 = vadd.f32 0.0, %v323
    %v325 = vpop.f32.mrf.mxu0
    %326 = vdwg.mxu0
    %v327 = vsel %vm107, %v311, %v324
    %v329 = vrot.slane %v327, 4
    %v331 = vadd.f32 %v202, %v329
    %v332 = vmul.f32 %v331, 0.5
    %v333 = vsel %vm112, %v331, %v332
    %v334 = vtanh.pop %v333
    %v335 = vmul.f32 %v334, 0.5
    %v336 = vadd.f32 %v335, 0.5
    %v337 = vsel %vm112, %v334, %v336
    %v339 = vrot.slane %v274, 4
    %v341 = vmul.f32 %v337, %v339
    %343 = vrot.lane.b32.xlu0 %v337, 64
    %v344 = vpop.permute.xlu0 %343
    %v346 = vmul.f32 %v337, %v344
    %348 = vrot.lane.b32.xlu0 %v346, 32
    %v349 = vpop.permute.xlu0 %348
    %v351 = vadd.f32 %v341, %v349
    %v352 = vtanh.pop %v351
    %354 = vrot.lane.b32.xlu0 %v352, 64
    %v355 = vpop.permute.xlu0 %354
    %v357 = vmul.f32 %v337, %v355
    %359 = vrot.lane.b32.xlu0 %v357, 32
    %v360 = vpop.permute.xlu0 %359
    %vm362 = vcmask 259076
    %363 = vst.msk [vmem:[#allocation2] sm:$0x30] %vm362, %v360
    %364 = vrot.lane.b32.xlu0 %v357, 64
    %v365 = vpop.permute.xlu0 %364
    %vm367 = vcmask 523526
    %368 = vst.msk [vmem:[#allocation2] sm:$0xc0] %vm367, %v365
    %369 = vst.msk [vmem:[#allocation2 + $0x12] sm:$0xc0] %vm367, %v365
    %370 = vst.msk [vmem:[#allocation2 + $0x16] sm:$0x30] %vm362, %v360
    %v371 = vpack.c.bf16 %v357, %v357
    %v373 = vrot.slane %v371, 2
    %374 = vrot.lane.b32.xlu0 %v373, 32
    %v375 = vpop.permute.xlu0 %374
    %v377 = vsel %vm226, %v375, 0
    %379 = vmatpush.bf16.msra.mxu0 0
    %380 = vmatpush.bf16.msra.mxu0 0
    %381 = vmatpush.bf16.msra.mxu0 0
    %382 = vmatpush.bf16.msra.mxu0 0
    %383 = vmatpush.bf16.msra.mxu0 0
    %384 = vmatpush.bf16.msra.mxu0 0
    %385 = vmatpush.bf16.msra.mxu0 %v220
    %386 = vmatpush.bf16.msra.mxu0 %v218
    %387 = vmatmul.bf16.gmra.mxu0 %v377
    %v388 = vpop.f32.mrf.mxu0
    %v389 = vadd.f32 0.0, %v388
    %v390 = vpop.f32.mrf.mxu0
    %391 = vdwg.mxu0
    %392 = vmatpush.bf16.msra.mxu0 0
    %393 = vmatpush.bf16.msra.mxu0 0
    %394 = vmatpush.bf16.msra.mxu0 0
    %395 = vmatpush.bf16.msra.mxu0 0
    %396 = vmatpush.bf16.msra.mxu0 0
    %397 = vmatpush.bf16.msra.mxu0 0
    %398 = vmatpush.bf16.msra.mxu0 %v221
    %399 = vmatpush.bf16.msra.mxu0 %v219
    %400 = vmatmul.bf16.gmra.mxu0 %v377
    %v401 = vpop.f32.mrf.mxu0
    %v402 = vadd.f32 0.0, %v401
    %v403 = vpop.f32.mrf.mxu0
    %404 = vdwg.mxu0
    %v405 = vsel %vm107, %v389, %v402
    %v406 = vadd.f32 %v203, %v405
    %v407 = vmul.f32 %v406, 0.5
    %v408 = vsel %vm112, %v406, %v407
    %v409 = vtanh.pop %v408
    %v410 = vmul.f32 %v409, 0.5
    %v411 = vadd.f32 %v410, 0.5
    %v412 = vsel %vm112, %v409, %v411
    %v414 = vrot.slane %v351, 4
    %v416 = vmul.f32 %v412, %v414
    %418 = vrot.lane.b32.xlu0 %v412, 64
    %v419 = vpop.permute.xlu0 %418
    %v421 = vmul.f32 %v412, %v419
    %423 = vrot.lane.b32.xlu0 %v421, 32
    %v424 = vpop.permute.xlu0 %423
    %v426 = vadd.f32 %v416, %v424
    %v427 = vtanh.pop %v426
    %429 = vrot.lane.b32.xlu0 %v427, 64
    %v430 = vpop.permute.xlu0 %429
    %v432 = vmul.f32 %v412, %v430
    %434 = vrot.lane.b32.xlu0 %v432, 32
    %v435 = vpop.permute.xlu0 %434
    %437 = vst.msk [vmem:[#allocation2 + $0x8] sm:$0x3] %vm285, %v435
    %438 = vrot.lane.b32.xlu0 %v432, 64
    %v439 = vpop.permute.xlu0 %438
    %441 = vst.msk [vmem:[#allocation2 + $0x8] sm:$0xc] %vm290, %v439
    %442 = vst.msk [vmem:[#allocation2 + $0x12] sm:$0xc] %vm290, %v439
    %443 = vst.msk [vmem:[#allocation2 + $0x16] sm:$0x3] %vm285, %v435
    %v444 = vpack.c.bf16 %v432, %v432
    %446 = vrot.lane.b32.xlu0 %v444, 32
    %v447 = vpop.permute.xlu0 %446
    %v449 = vsel %vm226, %v447, 0
    %451 = vmatpush.bf16.msra.mxu0 0
    %452 = vmatpush.bf16.msra.mxu0 0
    %453 = vmatpush.bf16.msra.mxu0 0
    %454 = vmatpush.bf16.msra.mxu0 0
    %455 = vmatpush.bf16.msra.mxu0 0
    %456 = vmatpush.bf16.msra.mxu0 0
    %457 = vmatpush.bf16.msra.mxu0 %v220
    %458 = vmatpush.bf16.msra.mxu0 %v218
    %459 = vmatmul.bf16.gmra.mxu0 %v449
    %v460 = vpop.f32.mrf.mxu0
    %v461 = vadd.f32 0.0, %v460
    %v462 = vpop.f32.mrf.mxu0
    %463 = vdwg.mxu0
    %464 = vmatpush.bf16.msra.mxu0 0
    %465 = vmatpush.bf16.msra.mxu0 0
    %466 = vmatpush.bf16.msra.mxu0 0
    %467 = vmatpush.bf16.msra.mxu0 0
    %468 = vmatpush.bf16.msra.mxu0 0
    %469 = vmatpush.bf16.msra.mxu0 0
    %470 = vmatpush.bf16.msra.mxu0 %v221
    %471 = vmatpush.bf16.msra.mxu0 %v219
    %472 = vmatmul.bf16.gmra.mxu0 %v449
    %v473 = vpop.f32.mrf.mxu0
    %v474 = vadd.f32 0.0, %v473
    %v475 = vpop.f32.mrf.mxu0
    %476 = vdwg.mxu0
    %v477 = vsel %vm107, %v461, %v474
    %v479 = vrot.slane %v477, 4
    %v481 = vadd.f32 %v203, %v479
    %v482 = vmul.f32 %v481, 0.5
    %v483 = vsel %vm112, %v481, %v482
    %v484 = vtanh.pop %v483
    %v485 = vmul.f32 %v484, 0.5
    %v486 = vadd.f32 %v485, 0.5
    %v487 = vsel %vm112, %v484, %v486
    %v489 = vrot.slane %v426, 4
    %v491 = vmul.f32 %v487, %v489
    %493 = vrot.lane.b32.xlu0 %v487, 64
    %v494 = vpop.permute.xlu0 %493
    %v496 = vmul.f32 %v487, %v494
    %498 = vrot.lane.b32.xlu0 %v496, 32
    %v499 = vpop.permute.xlu0 %498
    %v501 = vadd.f32 %v491, %v499
    %v502 = vtanh.pop %v501
    %504 = vrot.lane.b32.xlu0 %v502, 64
    %v505 = vpop.permute.xlu0 %504
    %v507 = vmul.f32 %v487, %v505
    %509 = vrot.lane.b32.xlu0 %v507, 32
    %v510 = vpop.permute.xlu0 %509
    %512 = vst.msk [vmem:[#allocation2 + $0x8] sm:$0x30] %vm362, %v510
    %513 = vrot.lane.b32.xlu0 %v507, 64
    %v514 = vpop.permute.xlu0 %513
    %516 = vst.msk [vmem:[#allocation2 + $0x8] sm:$0xc0] %vm367, %v514
    %517 = vst.msk [vmem:[#allocation2 + $0xa] sm:$0xc0] %vm367, %v514
    %518 = vst.msk [vmem:[#allocation2 + $0xe] sm:$0x30] %vm362, %v510
    %v519 = vpack.c.bf16 %v507, %v507
    %v521 = vrot.slane %v519, 2
    %522 = vrot.lane.b32.xlu0 %v521, 32
    %v523 = vpop.permute.xlu0 %522
    %v525 = vsel %vm226, %v523, 0
    %527 = vmatpush.bf16.msra.mxu0 0
    %528 = vmatpush.bf16.msra.mxu0 0
    %529 = vmatpush.bf16.msra.mxu0 0
    %530 = vmatpush.bf16.msra.mxu0 0
    %531 = vmatpush.bf16.msra.mxu0 0
    %532 = vmatpush.bf16.msra.mxu0 0
    %533 = vmatpush.bf16.msra.mxu0 %v220
    %534 = vmatpush.bf16.msra.mxu0 %v218
    %535 = vmatmul.bf16.gmra.mxu0 %v525
    %v536 = vpop.f32.mrf.mxu0
    %v537 = vadd.f32 0.0, %v536
    %v538 = vpop.f32.mrf.mxu0
    %539 = vdwg.mxu0
    %540 = vmatpush.bf16.msra.mxu0 0
    %541 = vmatpush.bf16.msra.mxu0 0
    %542 = vmatpush.bf16.msra.mxu0 0
    %543 = vmatpush.bf16.msra.mxu0 0
    %544 = vmatpush.bf16.msra.mxu0 0
    %545 = vmatpush.bf16.msra.mxu0 0
    %546 = vmatpush.bf16.msra.mxu0 %v221
    %547 = vmatpush.bf16.msra.mxu0 %v219
    %548 = vmatmul.bf16.gmra.mxu0 %v525
    %v549 = vpop.f32.mrf.mxu0
    %v550 = vadd.f32 0.0, %v549
    %v551 = vpop.f32.mrf.mxu0
    %552 = vdwg.mxu0
    %v553 = vsel %vm107, %v537, %v550
    %v554 = vadd.f32 %v204, %v553
    %v555 = vmul.f32 %v554, 0.5
    %v556 = vsel %vm112, %v554, %v555
    %v557 = vtanh.pop %v556
    %v558 = vmul.f32 %v557, 0.5
    %v559 = vadd.f32 %v558, 0.5
    %v560 = vsel %vm112, %v557, %v559
    %v562 = vrot.slane %v501, 4
    %v564 = vmul.f32 %v560, %v562
    %566 = vrot.lane.b32.xlu0 %v560, 64
    %v567 = vpop.permute.xlu0 %566
    %v569 = vmul.f32 %v560, %v567
    %571 = vrot.lane.b32.xlu0 %v569, 32
    %v572 = vpop.permute.xlu0 %571
    %v574 = vadd.f32 %v564, %v572
    %v575 = vtanh.pop %v574
    %577 = vrot.lane.b32.xlu0 %v575, 64
    %v578 = vpop.permute.xlu0 %577
    %v580 = vmul.f32 %v560, %v578
    %582 = vrot.lane.b32.xlu0 %v580, 32
    %v583 = vpop.permute.xlu0 %582
    %585 = vst.msk [vmem:[#allocation2 + $0x10] sm:$0x3] %vm285, %v583
    %586 = vrot.lane.b32.xlu0 %v580, 64
    %v587 = vpop.permute.xlu0 %586
    %589 = vst.msk [vmem:[#allocation2 + $0x10] sm:$0xc] %vm290, %v587
    %590 = vst.msk [vmem:[#allocation2 + $0xa] sm:$0xc] %vm290, %v587
    %591 = vst.msk [vmem:[#allocation2 + $0xe] sm:$0x3] %vm285, %v583
    %v592 = vpack.c.bf16 %v580, %v580
    %594 = vrot.lane.b32.xlu0 %v592, 32
    %v595 = vpop.permute.xlu0 %594
    %v597 = vsel %vm226, %v595, 0
    %599 = vmatpush.bf16.msra.mxu0 0
    %600 = vmatpush.bf16.msra.mxu0 0
    %601 = vmatpush.bf16.msra.mxu0 0
    %602 = vmatpush.bf16.msra.mxu0 0
    %603 = vmatpush.bf16.msra.mxu0 0
    %604 = vmatpush.bf16.msra.mxu0 0
    %605 = vmatpush.bf16.msra.mxu0 %v220
    %606 = vmatpush.bf16.msra.mxu0 %v218
    %607 = vmatmul.bf16.gmra.mxu0 %v597
    %v608 = vpop.f32.mrf.mxu0
    %v609 = vadd.f32 0.0, %v608
    %v610 = vpop.f32.mrf.mxu0
    %611 = vdwg.mxu0
    %612 = vmatpush.bf16.msra.mxu0 0
    %613 = vmatpush.bf16.msra.mxu0 0
    %614 = vmatpush.bf16.msra.mxu0 0
    %615 = vmatpush.bf16.msra.mxu0 0
    %616 = vmatpush.bf16.msra.mxu0 0
    %617 = vmatpush.bf16.msra.mxu0 0
    %618 = vmatpush.bf16.msra.mxu0 %v221
    %619 = vmatpush.bf16.msra.mxu0 %v219
    %620 = vmatmul.bf16.gmra.mxu0 %v597
    %v621 = vpop.f32.mrf.mxu0
    %v622 = vadd.f32 0.0, %v621
    %v623 = vpop.f32.mrf.mxu0
    %624 = vdwg.mxu0
    %v625 = vsel %vm107, %v609, %v622
    %v627 = vrot.slane %v625, 4
    %v629 = vadd.f32 %v204, %v627
    %v630 = vmul.f32 %v629, 0.5
    %v631 = vsel %vm112, %v629, %v630
    %v632 = vtanh.pop %v631
    %v633 = vmul.f32 %v632, 0.5
    %v634 = vadd.f32 %v633, 0.5
    %v635 = vsel %vm112, %v632, %v634
    %v637 = vrot.slane %v574, 4
    %v639 = vmul.f32 %v635, %v637
    %641 = vrot.lane.b32.xlu0 %v635, 64
    %v642 = vpop.permute.xlu0 %641
    %v644 = vmul.f32 %v635, %v642
    %646 = vrot.lane.b32.xlu0 %v644, 32
    %v647 = vpop.permute.xlu0 %646
    %v649 = vadd.f32 %v639, %v647
    %v650 = vtanh.pop %v649
    %652 = vrot.lane.b32.xlu0 %v650, 64
    %v653 = vpop.permute.xlu0 %652
    %v655 = vmul.f32 %v635, %v653
    %657 = vrot.lane.b32.xlu0 %v655, 32
    %v658 = vpop.permute.xlu0 %657
    %660 = vst.msk [vmem:[#allocation2 + $0x10] sm:$0x30] %vm362, %v658
    %661 = vrot.lane.b32.xlu0 %v655, 64
    %v662 = vpop.permute.xlu0 %661
    %664 = vst.msk [vmem:[#allocation2 + $0x10] sm:$0xc0] %vm367, %v662
    %665 = vst.msk [vmem:[#allocation2 + $0x2] sm:$0xc0] %vm367, %v662
    %666 = vst.msk [vmem:[#allocation2 + $0x6] sm:$0x30] %vm362, %v658
    %v667 = vpack.c.bf16 %v655, %v655
    %v669 = vrot.slane %v667, 2
    %670 = vrot.lane.b32.xlu0 %v669, 32
    %v671 = vpop.permute.xlu0 %670
    %v673 = vsel %vm226, %v671, 0
    %675 = vmatpush.bf16.msra.mxu0 0
    %676 = vmatpush.bf16.msra.mxu0 0
    %677 = vmatpush.bf16.msra.mxu0 0
    %678 = vmatpush.bf16.msra.mxu0 0
    %679 = vmatpush.bf16.msra.mxu0 0
    %680 = vmatpush.bf16.msra.mxu0 0
    %681 = vmatpush.bf16.msra.mxu0 %v220
    %682 = vmatpush.bf16.msra.mxu0 %v218
    %683 = vmatmul.bf16.gmra.mxu0 %v673
    %v684 = vpop.f32.mrf.mxu0
    %v685 = vadd.f32 0.0, %v684
    %v686 = vpop.f32.mrf.mxu0
    %687 = vdwg.mxu0
    %688 = vmatpush.bf16.msra.mxu0 0
    %689 = vmatpush.bf16.msra.mxu0 0
    %690 = vmatpush.bf16.msra.mxu0 0
    %691 = vmatpush.bf16.msra.mxu0 0
    %692 = vmatpush.bf16.msra.mxu0 0
    %693 = vmatpush.bf16.msra.mxu0 0
    %694 = vmatpush.bf16.msra.mxu0 %v221
    %695 = vmatpush.bf16.msra.mxu0 %v219
    %696 = vmatmul.bf16.gmra.mxu0 %v673
    %v697 = vpop.f32.mrf.mxu0
    %v698 = vadd.f32 0.0, %v697
    %v699 = vpop.f32.mrf.mxu0
    %700 = vdwg.mxu0
    %v701 = vsel %vm107, %v685, %v698
    %v702 = vadd.f32 %v205, %v701
    %v703 = vmul.f32 %v702, 0.5
    %v704 = vsel %vm112, %v702, %v703
    %v705 = vtanh.pop %v704
    %v706 = vmul.f32 %v705, 0.5
    %v707 = vadd.f32 %v706, 0.5
    %v708 = vsel %vm112, %v705, %v707
    %v710 = vrot.slane %v649, 4
    %v712 = vmul.f32 %v708, %v710
    %714 = vrot.lane.b32.xlu0 %v708, 64
    %v715 = vpop.permute.xlu0 %714
    %v717 = vmul.f32 %v708, %v715
    %719 = vrot.lane.b32.xlu0 %v717, 32
    %v720 = vpop.permute.xlu0 %719
    %v722 = vadd.f32 %v712, %v720
    %v723 = vtanh.pop %v722
    %725 = vrot.lane.b32.xlu0 %v723, 64
    %v726 = vpop.permute.xlu0 %725
    %v728 = vmul.f32 %v708, %v726
    %730 = vrot.lane.b32.xlu0 %v728, 32
    %v731 = vpop.permute.xlu0 %730
    %733 = vst.msk [vmem:[#allocation2 + $0x18] sm:$0x3] %vm285, %v731
    %734 = vrot.lane.b32.xlu0 %v728, 64
    %v735 = vpop.permute.xlu0 %734
    %737 = vst.msk [vmem:[#allocation2 + $0x18] sm:$0xc] %vm290, %v735
    %738 = vst.msk [vmem:[#allocation2 + $0x2] sm:$0xc] %vm290, %v735
    %739 = vst.msk [vmem:[#allocation2 + $0x6] sm:$0x3] %vm285, %v731
    %v740 = vpack.c.bf16 %v728, %v728
    %742 = vrot.lane.b32.xlu0 %v740, 32
    %v743 = vpop.permute.xlu0 %742
    %v745 = vsel %vm226, %v743, 0
    %747 = vmatpush.bf16.msra.mxu0 0
    %748 = vmatpush.bf16.msra.mxu0 0
    %749 = vmatpush.bf16.msra.mxu0 0
    %750 = vmatpush.bf16.msra.mxu0 0
    %751 = vmatpush.bf16.msra.mxu0 0
    %752 = vmatpush.bf16.msra.mxu0 0
    %753 = vmatpush.bf16.msra.mxu0 %v220
    %754 = vmatpush.bf16.msra.mxu0 %v218
    %755 = vmatmul.bf16.gmra.mxu0 %v745
    %v756 = vpop.f32.mrf.mxu0
    %v757 = vadd.f32 0.0, %v756
    %v758 = vpop.f32.mrf.mxu0
    %759 = vdwg.mxu0
    %760 = vmatpush.bf16.msra.mxu0 0
    %761 = vmatpush.bf16.msra.mxu0 0
    %762 = vmatpush.bf16.msra.mxu0 0
    %763 = vmatpush.bf16.msra.mxu0 0
    %764 = vmatpush.bf16.msra.mxu0 0
    %765 = vmatpush.bf16.msra.mxu0 0
    %766 = vmatpush.bf16.msra.mxu0 %v221
    %767 = vmatpush.bf16.msra.mxu0 %v219
    %768 = vmatmul.bf16.gmra.mxu0 %v745
    %v769 = vpop.f32.mrf.mxu0
    %v770 = vadd.f32 0.0, %v769
    %v771 = vpop.f32.mrf.mxu0
    %772 = vdwg.mxu0
    %v773 = vsel %vm107, %v757, %v770
    %v775 = vrot.slane %v773, 4
    %v777 = vadd.f32 %v205, %v775
    %v778 = vmul.f32 %v777, 0.5
    %v779 = vsel %vm112, %v777, %v778
    %v780 = vtanh.pop %v779
    %v781 = vmul.f32 %v780, 0.5
    %v782 = vadd.f32 %v781, 0.5
    %v783 = vsel %vm112, %v780, %v782
    %v785 = vrot.slane %v722, 4
    %v787 = vmul.f32 %v783, %v785
    %789 = vrot.lane.b32.xlu0 %v783, 64
    %v790 = vpop.permute.xlu0 %789
    %v792 = vmul.f32 %v783, %v790
    %794 = vrot.lane.b32.xlu0 %v792, 32
    %v795 = vpop.permute.xlu0 %794
    %v797 = vadd.f32 %v787, %v795
    %v798 = vtanh.pop %v797
    %800 = vrot.lane.b32.xlu0 %v798, 64
    %v801 = vpop.permute.xlu0 %800
    %v803 = vmul.f32 %v783, %v801
    %805 = vrot.lane.b32.xlu0 %v803, 32
    %v806 = vpop.permute.xlu0 %805
    %808 = vst.msk [vmem:[#allocation2 + $0x18] sm:$0x30] %vm362, %v806
    %809 = vrot.lane.b32.xlu0 %v803, 64
    %v810 = vpop.permute.xlu0 %809
    %812 = vst.msk [vmem:[#allocation2 + $0x18] sm:$0xc0] %vm367, %v810
    %813 = vst.msk [vmem:[#allocation2 - $0x6] sm:$0xc0] %vm367, %v810
    %814 = vst.msk [vmem:[#allocation2 - $0x2] sm:$0x30] %vm362, %v806
    %v815 = vld [vmem:[#allocation2] sm:$0xff]
    %v816 = vld [vmem:[#allocation2 + $0x8] sm:$0xff]
    %v817 = vld [vmem:[#allocation2 + $0x10] sm:$0xff]
    %v818 = vld [vmem:[#allocation2 + $0x18] sm:$0xff]
    %v819 = vld [vmem:[%s4] sm:$0xff]
    %v820 = vld [vmem:[%s4 + $0x8] sm:$0xff]
    %v821 = vld [vmem:[%s4 + $0x10] sm:$0xff]
    %v822 = vld [vmem:[%s4 + $0x18] sm:$0xff]
    %v823 = vld [vmem:[%s4 + $0x20] sm:$0xff]
    %v824 = vld [vmem:[%s4 + $0x28] sm:$0xff]
    %v825 = vld [vmem:[%s4 + $0x30] sm:$0xff]
    %v826 = vld [vmem:[%s4 + $0x38] sm:$0xff]
    %v827 = vld [vmem:[%s4 + $0x40] sm:$0xff]
    %v828 = vld [vmem:[%s4 + $0x48] sm:$0xff]
    %v829 = vld [vmem:[%s4 + $0x50] sm:$0xff]
    %v830 = vld [vmem:[%s4 + $0x58] sm:$0xff]
    %v831 = vld [vmem:[%s4 + $0x60] sm:$0xff]
    %v832 = vld [vmem:[%s4 + $0x68] sm:$0xff]
    %v833 = vld [vmem:[%s4 + $0x70] sm:$0xff]
    %v834 = vld [vmem:[%s4 + $0x78] sm:$0xff]
    %v835 = vld [vmem:[%s5] sm:$0x3]
    %v836 = vld [vmem:[#allocation3] sm:$0xff]
    %v837 = vld [vmem:[#allocation3 + $0x8] sm:$0xff]
    %v838 = vld [vmem:[#allocation3 + $0x10] sm:$0xff]
    %v839 = vld [vmem:[#allocation3 + $0x18] sm:$0xff]
    %v841 = vperm.slane %v835, 0
    %v842 = vperm.slane %v835, 1
    %vm845 = vcmask 523264
    %v847 = vsel %vm845, %v815, 0
    %v850 = vsel %vm845, %v816, 0
    %v853 = vsel %vm845, %v817, 0
    %v856 = vsel %vm845, %v818, 0
    %858 = vmatpush.msra.mxu0 0.0
    %859 = vmatpush.msra.mxu0 0.0
    %860 = vmatpush.msra.mxu0 0.0
    %861 = vmatpush.msra.mxu0 0.0
    %862 = vmatpush.msra.mxu0 0.0
    %863 = vmatpush.msra.mxu0 0.0
    %864 = vmatpush.msra.mxu0 0.0
    %865 = vmatpush.msra.mxu0 0.0
    %866 = vmatpush.msra.mxu0 %v833
    %867 = vmatpush.msra.mxu0 %v831
    %868 = vmatpush.msra.mxu0 %v829
    %869 = vmatpush.msra.mxu0 %v827
    %870 = vmatpush.msra.mxu0 %v825
    %871 = vmatpush.msra.mxu0 %v823
    %872 = vmatpush.msra.mxu0 %v821
    %873 = vmatpush.msra.mxu0 %v819
    %874 = vmatmul.f32.gmra.mxu0 %v847
    %v875 = vpop.f32.mrf.mxu0
    %v876 = vadd.f32 %v841, %v875
    %877 = vmatmul.f32.gmra.mxu0 %v850
    %v878 = vpop.f32.mrf.mxu0
    %v879 = vadd.f32 %v841, %v878
    %880 = vmatmul.f32.gmra.mxu0 %v853
    %v881 = vpop.f32.mrf.mxu0
    %v882 = vadd.f32 %v841, %v881
    %883 = vmatmul.f32.gmra.mxu0 %v856
    %v884 = vpop.f32.mrf.mxu0
    %v885 = vadd.f32 %v841, %v884
    %886 = vdwg.mxu0
    %887 = vmatpush.msra.mxu0 0.0
    %888 = vmatpush.msra.mxu0 0.0
    %889 = vmatpush.msra.mxu0 0.0
    %890 = vmatpush.msra.mxu0 0.0
    %891 = vmatpush.msra.mxu0 0.0
    %892 = vmatpush.msra.mxu0 0.0
    %893 = vmatpush.msra.mxu0 0.0
    %894 = vmatpush.msra.mxu0 0.0
    %895 = vmatpush.msra.mxu0 %v834
    %896 = vmatpush.msra.mxu0 %v832
    %897 = vmatpush.msra.mxu0 %v830
    %898 = vmatpush.msra.mxu0 %v828
    %899 = vmatpush.msra.mxu0 %v826
    %900 = vmatpush.msra.mxu0 %v824
    %901 = vmatpush.msra.mxu0 %v822
    %902 = vmatpush.msra.mxu0 %v820
    %903 = vmatmul.f32.gmra.mxu0 %v847
    %v904 = vpop.f32.mrf.mxu0
    %v905 = vadd.f32 %v842, %v904
    %906 = vmatmul.f32.gmra.mxu0 %v850
    %v907 = vpop.f32.mrf.mxu0
    %v908 = vadd.f32 %v842, %v907
    %909 = vmatmul.f32.gmra.mxu0 %v853
    %v910 = vpop.f32.mrf.mxu0
    %v911 = vadd.f32 %v842, %v910
    %912 = vmatmul.f32.gmra.mxu0 %v856
    %v913 = vpop.f32.mrf.mxu0
    %v914 = vadd.f32 %v842, %v913
    %915 = vdwg.mxu0
    %v916 = vsel %vm103, %v876, %v905
    %v917 = vsel %vm104, %v879, %v908
    %v918 = vsel %vm105, %v882, %v911
    %v919 = vsel %vm106, %v885, %v914
    %v924 = vunpack.c.l.b16 %v836
    %v925 = vunpack.c.h.b16 %v836
    %v926 = vunpack.c.l.b16 %v837
    %v927 = vunpack.c.h.b16 %v837
    %v928 = vunpack.c.l.b16 %v838
    %v929 = vunpack.c.h.b16 %v838
    %v930 = vunpack.c.l.b16 %v839
    %v931 = vunpack.c.h.b16 %v839
    %v932 = vpack.c.b16 %v926, %v924
    %v933 = vpack.c.b16 %v927, %v925
    %v934 = vpack.c.b16 %v930, %v928
    %v935 = vpack.c.b16 %v931, %v929
    %940 = vmatpush.bf16.msra.mxu0 0
    %941 = vmatpush.bf16.msra.mxu0 0
    %942 = vmatpush.bf16.msra.mxu0 0
    %943 = vmatpush.bf16.msra.mxu0 0
    %944 = vmatpush.bf16.msra.mxu0 0
    %945 = vmatpush.bf16.msra.mxu0 0
    %946 = vmatpush.bf16.msra.mxu0 %v934
    %947 = vmatpush.bf16.msra.mxu0 %v932
    %948 = vmatmul.bf16.gmra.mxu0 %v228
    %v949 = vpop.f32.mrf.mxu0
    %v950 = vadd.f32 0.0, %v949
    %v951 = vpop.f32.mrf.mxu0
    %952 = vdwg.mxu0
    %953 = vmatpush.bf16.msra.mxu0 0
    %954 = vmatpush.bf16.msra.mxu0 0
    %955 = vmatpush.bf16.msra.mxu0 0
    %956 = vmatpush.bf16.msra.mxu0 0
    %957 = vmatpush.bf16.msra.mxu0 0
    %958 = vmatpush.bf16.msra.mxu0 0
    %959 = vmatpush.bf16.msra.mxu0 %v935
    %960 = vmatpush.bf16.msra.mxu0 %v933
    %961 = vmatmul.bf16.gmra.mxu0 %v228
    %v962 = vpop.f32.mrf.mxu0
    %v963 = vadd.f32 0.0, %v962
    %v964 = vpop.f32.mrf.mxu0
    %965 = vdwg.mxu0
    %v966 = vsel %vm107, %v950, %v963
    %v967 = vadd.f32 %v916, %v966
    %v968 = vmul.f32 %v967, 0.5
    %v969 = vsel %vm112, %v967, %v968
    %v970 = vtanh.pop %v969
    %v971 = vmul.f32 %v970, 0.5
    %v972 = vadd.f32 %v971, 0.5
    %v973 = vsel %vm112, %v970, %v972
    %v974 = vmul.f32 %v973, 0.0
    %976 = vrot.lane.b32.xlu0 %v973, 64
    %v977 = vpop.permute.xlu0 %976
    %v979 = vmul.f32 %v973, %v977
    %981 = vrot.lane.b32.xlu0 %v979, 32
    %v982 = vpop.permute.xlu0 %981
    %v984 = vadd.f32 %v974, %v982
    %v985 = vtanh.pop %v984
    %987 = vrot.lane.b32.xlu0 %v985, 64
    %v988 = vpop.permute.xlu0 %987
    %v990 = vmul.f32 %v973, %v988
    %v991 = vpack.c.bf16 %v990, %v990
    %993 = vrot.lane.b32.xlu0 %v991, 32
    %v994 = vpop.permute.xlu0 %993
    %v996 = vsel %vm226, %v994, 0
    %998 = vmatpush.bf16.msra.mxu0 0
    %999 = vmatpush.bf16.msra.mxu0 0
    %1000 = vmatpush.bf16.msra.mxu0 0
    %1001 = vmatpush.bf16.msra.mxu0 0
    %1002 = vmatpush.bf16.msra.mxu0 0
    %1003 = vmatpush.bf16.msra.mxu0 0
    %1004 = vmatpush.bf16.msra.mxu0 %v934
    %1005 = vmatpush.bf16.msra.mxu0 %v932
    %1006 = vmatmul.bf16.gmra.mxu0 %v996
    %v1007 = vpop.f32.mrf.mxu0
    %v1008 = vadd.f32 0.0, %v1007
    %v1009 = vpop.f32.mrf.mxu0
    %1010 = vdwg.mxu0
    %1011 = vmatpush.bf16.msra.mxu0 0
    %1012 = vmatpush.bf16.msra.mxu0 0
    %1013 = vmatpush.bf16.msra.mxu0 0
    %1014 = vmatpush.bf16.msra.mxu0 0
    %1015 = vmatpush.bf16.msra.mxu0 0
    %1016 = vmatpush.bf16.msra.mxu0 0
    %1017 = vmatpush.bf16.msra.mxu0 %v935
    %1018 = vmatpush.bf16.msra.mxu0 %v933
    %1019 = vmatmul.bf16.gmra.mxu0 %v996
    %v1020 = vpop.f32.mrf.mxu0
    %v1021 = vadd.f32 0.0, %v1020
    %v1022 = vpop.f32.mrf.mxu0
    %1023 = vdwg.mxu0
    %v1024 = vsel %vm107, %v1008, %v1021
    %v1026 = vrot.slane %v1024, 4
    %v1028 = vadd.f32 %v916, %v1026
    %v1029 = vmul.f32 %v1028, 0.5
    %v1030 = vsel %vm112, %v1028, %v1029
    %v1031 = vtanh.pop %v1030
    %v1032 = vmul.f32 %v1031, 0.5
    %v1033 = vadd.f32 %v1032, 0.5
    %v1034 = vsel %vm112, %v1031, %v1033
    %v1036 = vrot.slane %v984, 4
    %v1038 = vmul.f32 %v1034, %v1036
    %1040 = vrot.lane.b32.xlu0 %v1034, 64
    %v1041 = vpop.permute.xlu0 %1040
    %v1043 = vmul.f32 %v1034, %v1041
    %1045 = vrot.lane.b32.xlu0 %v1043, 32
    %v1046 = vpop.permute.xlu0 %1045
    %v1048 = vadd.f32 %v1038, %v1046
    %v1049 = vtanh.pop %v1048
    %1051 = vrot.lane.b32.xlu0 %v1049, 64
    %v1052 = vpop.permute.xlu0 %1051
    %v1054 = vmul.f32 %v1034, %v1052
    %v1055 = vpack.c.bf16 %v1054, %v1054
    %v1057 = vrot.slane %v1055, 2
    %1058 = vrot.lane.b32.xlu0 %v1057, 32
    %v1059 = vpop.permute.xlu0 %1058
    %v1061 = vsel %vm226, %v1059, 0
    %1063 = vmatpush.bf16.msra.mxu0 0
    %1064 = vmatpush.bf16.msra.mxu0 0
    %1065 = vmatpush.bf16.msra.mxu0 0
    %1066 = vmatpush.bf16.msra.mxu0 0
    %1067 = vmatpush.bf16.msra.mxu0 0
    %1068 = vmatpush.bf16.msra.mxu0 0
    %1069 = vmatpush.bf16.msra.mxu0 %v934
    %1070 = vmatpush.bf16.msra.mxu0 %v932
    %1071 = vmatmul.bf16.gmra.mxu0 %v1061
    %v1072 = vpop.f32.mrf.mxu0
    %v1073 = vadd.f32 0.0, %v1072
    %v1074 = vpop.f32.mrf.mxu0
    %1075 = vdwg.mxu0
    %1076 = vmatpush.bf16.msra.mxu0 0
    %1077 = vmatpush.bf16.msra.mxu0 0
    %1078 = vmatpush.bf16.msra.mxu0 0
    %1079 = vmatpush.bf16.msra.mxu0 0
    %1080 = vmatpush.bf16.msra.mxu0 0
    %1081 = vmatpush.bf16.msra.mxu0 0
    %1082 = vmatpush.bf16.msra.mxu0 %v935
    %1083 = vmatpush.bf16.msra.mxu0 %v933
    %1084 = vmatmul.bf16.gmra.mxu0 %v1061
    %v1085 = vpop.f32.mrf.mxu0
    %v1086 = vadd.f32 0.0, %v1085
    %v1087 = vpop.f32.mrf.mxu0
    %1088 = vdwg.mxu0
    %v1089 = vsel %vm107, %v1073, %v1086
    %v1090 = vadd.f32 %v917, %v1089
    %v1091 = vmul.f32 %v1090, 0.5
    %v1092 = vsel %vm112, %v1090, %v1091
    %v1093 = vtanh.pop %v1092
    %v1094 = vmul.f32 %v1093, 0.5
    %v1095 = vadd.f32 %v1094, 0.5
    %v1096 = vsel %vm112, %v1093, %v1095
    %v1098 = vrot.slane %v1048, 4
    %v1100 = vmul.f32 %v1096, %v1098
    %1102 = vrot.lane.b32.xlu0 %v1096, 64
    %v1103 = vpop.permute.xlu0 %1102
    %v1105 = vmul.f32 %v1096, %v1103
    %1107 = vrot.lane.b32.xlu0 %v1105, 32
    %v1108 = vpop.permute.xlu0 %1107
    %v1110 = vadd.f32 %v1100, %v1108
    %v1111 = vtanh.pop %v1110
    %1113 = vrot.lane.b32.xlu0 %v1111, 64
    %v1114 = vpop.permute.xlu0 %1113
    %v1116 = vmul.f32 %v1096, %v1114
    %v1117 = vpack.c.bf16 %v1116, %v1116
    %1119 = vrot.lane.b32.xlu0 %v1117, 32
    %v1120 = vpop.permute.xlu0 %1119
    %v1122 = vsel %vm226, %v1120, 0
    %1124 = vmatpush.bf16.msra.mxu0 0
    %1125 = vmatpush.bf16.msra.mxu0 0
    %1126 = vmatpush.bf16.msra.mxu0 0
    %1127 = vmatpush.bf16.msra.mxu0 0
    %1128 = vmatpush.bf16.msra.mxu0 0
    %1129 = vmatpush.bf16.msra.mxu0 0
    %1130 = vmatpush.bf16.msra.mxu0 %v934
    %1131 = vmatpush.bf16.msra.mxu0 %v932
    %1132 = vmatmul.bf16.gmra.mxu0 %v1122
    %v1133 = vpop.f32.mrf.mxu0
    %v1134 = vadd.f32 0.0, %v1133
    %v1135 = vpop.f32.mrf.mxu0
    %1136 = vdwg.mxu0
    %1137 = vmatpush.bf16.msra.mxu0 0
    %1138 = vmatpush.bf16.msra.mxu0 0
    %1139 = vmatpush.bf16.msra.mxu0 0
    %1140 = vmatpush.bf16.msra.mxu0 0
    %1141 = vmatpush.bf16.msra.mxu0 0
    %1142 = vmatpush.bf16.msra.mxu0 0
    %1143 = vmatpush.bf16.msra.mxu0 %v935
    %1144 = vmatpush.bf16.msra.mxu0 %v933
    %1145 = vmatmul.bf16.gmra.mxu0 %v1122
    %v1146 = vpop.f32.mrf.mxu0
    %v1147 = vadd.f32 0.0, %v1146
    %v1148 = vpop.f32.mrf.mxu0
    %1149 = vdwg.mxu0
    %v1150 = vsel %vm107, %v1134, %v1147
    %v1152 = vrot.slane %v1150, 4
    %v1154 = vadd.f32 %v917, %v1152
    %v1155 = vmul.f32 %v1154, 0.5
    %v1156 = vsel %vm112, %v1154, %v1155
    %v1157 = vtanh.pop %v1156
    %v1158 = vmul.f32 %v1157, 0.5
    %v1159 = vadd.f32 %v1158, 0.5
    %v1160 = vsel %vm112, %v1157, %v1159
    %v1162 = vrot.slane %v1110, 4
    %v1164 = vmul.f32 %v1160, %v1162
    %1166 = vrot.lane.b32.xlu0 %v1160, 64
    %v1167 = vpop.permute.xlu0 %1166
    %v1169 = vmul.f32 %v1160, %v1167
    %1171 = vrot.lane.b32.xlu0 %v1169, 32
    %v1172 = vpop.permute.xlu0 %1171
    %v1174 = vadd.f32 %v1164, %v1172
    %v1175 = vtanh.pop %v1174
    %1177 = vrot.lane.b32.xlu0 %v1175, 64
    %v1178 = vpop.permute.xlu0 %1177
    %v1180 = vmul.f32 %v1160, %v1178
    %v1181 = vpack.c.bf16 %v1180, %v1180
    %v1183 = vrot.slane %v1181, 2
    %1184 = vrot.lane.b32.xlu0 %v1183, 32
    %v1185 = vpop.permute.xlu0 %1184
    %v1187 = vsel %vm226, %v1185, 0
    %1189 = vmatpush.bf16.msra.mxu0 0
    %1190 = vmatpush.bf16.msra.mxu0 0
    %1191 = vmatpush.bf16.msra.mxu0 0
    %1192 = vmatpush.bf16.msra.mxu0 0
    %1193 = vmatpush.bf16.msra.mxu0 0
    %1194 = vmatpush.bf16.msra.mxu0 0
    %1195 = vmatpush.bf16.msra.mxu0 %v934
    %1196 = vmatpush.bf16.msra.mxu0 %v932
    %1197 = vmatmul.bf16.gmra.mxu0 %v1187
    %v1198 = vpop.f32.mrf.mxu0
    %v1199 = vadd.f32 0.0, %v1198
    %v1200 = vpop.f32.mrf.mxu0
    %1201 = vdwg.mxu0
    %1202 = vmatpush.bf16.msra.mxu0 0
    %1203 = vmatpush.bf16.msra.mxu0 0
    %1204 = vmatpush.bf16.msra.mxu0 0
    %1205 = vmatpush.bf16.msra.mxu0 0
    %1206 = vmatpush.bf16.msra.mxu0 0
    %1207 = vmatpush.bf16.msra.mxu0 0
    %1208 = vmatpush.bf16.msra.mxu0 %v935
    %1209 = vmatpush.bf16.msra.mxu0 %v933
    %1210 = vmatmul.bf16.gmra.mxu0 %v1187
    %v1211 = vpop.f32.mrf.mxu0
    %v1212 = vadd.f32 0.0, %v1211
    %v1213 = vpop.f32.mrf.mxu0
    %1214 = vdwg.mxu0
    %v1215 = vsel %vm107, %v1199, %v1212
    %v1216 = vadd.f32 %v918, %v1215
    %v1217 = vmul.f32 %v1216, 0.5
    %v1218 = vsel %vm112, %v1216, %v1217
    %v1219 = vtanh.pop %v1218
    %v1220 = vmul.f32 %v1219, 0.5
    %v1221 = vadd.f32 %v1220, 0.5
    %v1222 = vsel %vm112, %v1219, %v1221
    %v1224 = vrot.slane %v1174, 4
    %v1226 = vmul.f32 %v1222, %v1224
    %1228 = vrot.lane.b32.xlu0 %v1222, 64
    %v1229 = vpop.permute.xlu0 %1228
    %v1231 = vmul.f32 %v1222, %v1229
    %1233 = vrot.lane.b32.xlu0 %v1231, 32
    %v1234 = vpop.permute.xlu0 %1233
    %v1236 = vadd.f32 %v1226, %v1234
    %v1237 = vtanh.pop %v1236
    %1239 = vrot.lane.b32.xlu0 %v1237, 64
    %v1240 = vpop.permute.xlu0 %1239
    %v1242 = vmul.f32 %v1222, %v1240
    %v1243 = vpack.c.bf16 %v1242, %v1242
    %1245 = vrot.lane.b32.xlu0 %v1243, 32
    %v1246 = vpop.permute.xlu0 %1245
    %v1248 = vsel %vm226, %v1246, 0
    %1250 = vmatpush.bf16.msra.mxu0 0
    %1251 = vmatpush.bf16.msra.mxu0 0
    %1252 = vmatpush.bf16.msra.mxu0 0
    %1253 = vmatpush.bf16.msra.mxu0 0
    %1254 = vmatpush.bf16.msra.mxu0 0
    %1255 = vmatpush.bf16.msra.mxu0 0
    %1256 = vmatpush.bf16.msra.mxu0 %v934
    %1257 = vmatpush.bf16.msra.mxu0 %v932
    %1258 = vmatmul.bf16.gmra.mxu0 %v1248
    %v1259 = vpop.f32.mrf.mxu0
    %v1260 = vadd.f32 0.0, %v1259
    %v1261 = vpop.f32.mrf.mxu0
    %1262 = vdwg.mxu0
    %1263 = vmatpush.bf16.msra.mxu0 0
    %1264 = vmatpush.bf16.msra.mxu0 0
    %1265 = vmatpush.bf16.msra.mxu0 0
    %1266 = vmatpush.bf16.msra.mxu0 0
    %1267 = vmatpush.bf16.msra.mxu0 0
    %1268 = vmatpush.bf16.msra.mxu0 0
    %1269 = vmatpush.bf16.msra.mxu0 %v935
    %1270 = vmatpush.bf16.msra.mxu0 %v933
    %1271 = vmatmul.bf16.gmra.mxu0 %v1248
    %v1272 = vpop.f32.mrf.mxu0
    %v1273 = vadd.f32 0.0, %v1272
    %v1274 = vpop.f32.mrf.mxu0
    %1275 = vdwg.mxu0
    %v1276 = vsel %vm107, %v1260, %v1273
    %v1278 = vrot.slane %v1276, 4
    %v1280 = vadd.f32 %v918, %v1278
    %v1281 = vmul.f32 %v1280, 0.5
    %v1282 = vsel %vm112, %v1280, %v1281
    %v1283 = vtanh.pop %v1282
    %v1284 = vmul.f32 %v1283, 0.5
    %v1285 = vadd.f32 %v1284, 0.5
    %v1286 = vsel %vm112, %v1283, %v1285
    %v1288 = vrot.slane %v1236, 4
    %v1290 = vmul.f32 %v1286, %v1288
    %1292 = vrot.lane.b32.xlu0 %v1286, 64
    %v1293 = vpop.permute.xlu0 %1292
    %v1295 = vmul.f32 %v1286, %v1293
    %1297 = vrot.lane.b32.xlu0 %v1295, 32
    %v1298 = vpop.permute.xlu0 %1297
    %v1300 = vadd.f32 %v1290, %v1298
    %v1301 = vtanh.pop %v1300
    %1303 = vrot.lane.b32.xlu0 %v1301, 64
    %v1304 = vpop.permute.xlu0 %1303
    %v1306 = vmul.f32 %v1286, %v1304
    %v1307 = vpack.c.bf16 %v1306, %v1306
    %v1309 = vrot.slane %v1307, 2
    %1310 = vrot.lane.b32.xlu0 %v1309, 32
    %v1311 = vpop.permute.xlu0 %1310
    %v1313 = vsel %vm226, %v1311, 0
    %1315 = vmatpush.bf16.msra.mxu0 0
    %1316 = vmatpush.bf16.msra.mxu0 0
    %1317 = vmatpush.bf16.msra.mxu0 0
    %1318 = vmatpush.bf16.msra.mxu0 0
    %1319 = vmatpush.bf16.msra.mxu0 0
    %1320 = vmatpush.bf16.msra.mxu0 0
    %1321 = vmatpush.bf16.msra.mxu0 %v934
    %1322 = vmatpush.bf16.msra.mxu0 %v932
    %1323 = vmatmul.bf16.gmra.mxu0 %v1313
    %v1324 = vpop.f32.mrf.mxu0
    %v1325 = vadd.f32 0.0, %v1324
    %v1326 = vpop.f32.mrf.mxu0
    %1327 = vdwg.mxu0
    %1328 = vmatpush.bf16.msra.mxu0 0
    %1329 = vmatpush.bf16.msra.mxu0 0
    %1330 = vmatpush.bf16.msra.mxu0 0
    %1331 = vmatpush.bf16.msra.mxu0 0
    %1332 = vmatpush.bf16.msra.mxu0 0
    %1333 = vmatpush.bf16.msra.mxu0 0
    %1334 = vmatpush.bf16.msra.mxu0 %v935
    %1335 = vmatpush.bf16.msra.mxu0 %v933
    %1336 = vmatmul.bf16.gmra.mxu0 %v1313
    %v1337 = vpop.f32.mrf.mxu0
    %v1338 = vadd.f32 0.0, %v1337
    %v1339 = vpop.f32.mrf.mxu0
    %1340 = vdwg.mxu0
    %v1341 = vsel %vm107, %v1325, %v1338
    %v1342 = vadd.f32 %v919, %v1341
    %v1343 = vmul.f32 %v1342, 0.5
    %v1344 = vsel %vm112, %v1342, %v1343
    %v1345 = vtanh.pop %v1344
    %v1346 = vmul.f32 %v1345, 0.5
    %v1347 = vadd.f32 %v1346, 0.5
    %v1348 = vsel %vm112, %v1345, %v1347
    %v1350 = vrot.slane %v1300, 4
    %v1352 = vmul.f32 %v1348, %v1350
    %1354 = vrot.lane.b32.xlu0 %v1348, 64
    %v1355 = vpop.permute.xlu0 %1354
    %v1357 = vmul.f32 %v1348, %v1355
    %1359 = vrot.lane.b32.xlu0 %v1357, 32
    %v1360 = vpop.permute.xlu0 %1359
    %v1362 = vadd.f32 %v1352, %v1360
    %v1363 = vtanh.pop %v1362
    %1365 = vrot.lane.b32.xlu0 %v1363, 64
    %v1366 = vpop.permute.xlu0 %1365
    %v1368 = vmul.f32 %v1348, %v1366
    %v1369 = vpack.c.bf16 %v1368, %v1368
    %1371 = vrot.lane.b32.xlu0 %v1369, 32
    %v1372 = vpop.permute.xlu0 %1371
    %v1374 = vsel %vm226, %v1372, 0
    %1376 = vmatpush.bf16.msra.mxu0 0
    %1377 = vmatpush.bf16.msra.mxu0 0
    %1378 = vmatpush.bf16.msra.mxu0 0
    %1379 = vmatpush.bf16.msra.mxu0 0
    %1380 = vmatpush.bf16.msra.mxu0 0
    %1381 = vmatpush.bf16.msra.mxu0 0
    %1382 = vmatpush.bf16.msra.mxu0 %v934
    %1383 = vmatpush.bf16.msra.mxu0 %v932
    %1384 = vmatmul.bf16.gmra.mxu0 %v1374
    %v1385 = vpop.f32.mrf.mxu0
    %v1386 = vadd.f32 0.0, %v1385
    %v1387 = vpop.f32.mrf.mxu0
    %1388 = vdwg.mxu0
    %1389 = vmatpush.bf16.msra.mxu0 0
    %1390 = vmatpush.bf16.msra.mxu0 0
    %1391 = vmatpush.bf16.msra.mxu0 0
    %1392 = vmatpush.bf16.msra.mxu0 0
    %1393 = vmatpush.bf16.msra.mxu0 0
    %1394 = vmatpush.bf16.msra.mxu0 0
    %1395 = vmatpush.bf16.msra.mxu0 %v935
    %1396 = vmatpush.bf16.msra.mxu0 %v933
    %1397 = vmatmul.bf16.gmra.mxu0 %v1374
    %v1398 = vpop.f32.mrf.mxu0
    %v1399 = vadd.f32 0.0, %v1398
    %v1400 = vpop.f32.mrf.mxu0
    %1401 = vdwg.mxu0
    %v1402 = vsel %vm107, %v1386, %v1399
    %v1404 = vrot.slane %v1402, 4
    %v1406 = vadd.f32 %v919, %v1404
    %v1407 = vmul.f32 %v1406, 0.5
    %v1408 = vsel %vm112, %v1406, %v1407
    %v1409 = vtanh.pop %v1408
    %v1410 = vmul.f32 %v1409, 0.5
    %v1411 = vadd.f32 %v1410, 0.5
    %v1412 = vsel %vm112, %v1409, %v1411
    %v1414 = vrot.slane %v1362, 4
    %v1416 = vmul.f32 %v1412, %v1414
    %1418 = vrot.lane.b32.xlu0 %v1412, 64
    %v1419 = vpop.permute.xlu0 %1418
    %v1421 = vmul.f32 %v1412, %v1419
    %1423 = vrot.lane.b32.xlu0 %v1421, 32
    %v1424 = vpop.permute.xlu0 %1423
    %v1426 = vadd.f32 %v1416, %v1424
    %v1427 = vtanh.pop %v1426
    %1429 = vrot.lane.b32.xlu0 %v1427, 64
    %v1430 = vpop.permute.xlu0 %1429
    %v1432 = vmul.f32 %v1412, %v1430
    %1434 = vrot.lane.b32.xlu0 %v1432, 32
    %v1435 = vpop.permute.xlu0 %1434
    %v1437 = vrot.slane %v1432, 2
    %1438 = vrot.lane.b32.xlu0 %v1437, 64
    %v1439 = vpop.permute.xlu0 %1438
    %v1441 = vsel %vm226, %v1435, %v1439
    %v1442 = vld [vmem:[%s7] sm:$0xff]
    %v1443 = vld [vmem:[%s7 + $0x8] sm:$0xff]
    %v1444 = vld [vmem:[%s7 + $0x10] sm:$0xff]
    %v1445 = vld [vmem:[%s7 + $0x18] sm:$0xff]
    %v1446 = vld [vmem:[%s7 + $0x20] sm:$0xff]
    %v1447 = vld [vmem:[%s7 + $0x28] sm:$0xff]
    %v1448 = vld [vmem:[%s7 + $0x30] sm:$0xff]
    %v1449 = vld [vmem:[%s7 + $0x38] sm:$0xff]
    %v1450 = vld [vmem:[%s8] sm:$0x1]
    %v1452 = vperm.slane %v1450, 0
    %v1455 = vrot.slane %v1441, 4
    %v1456 = vsel %vm845, %v1455, 0
    %1458 = vmatpush.msra.mxu0 0.0
    %1459 = vmatpush.msra.mxu0 0.0
    %1460 = vmatpush.msra.mxu0 0.0
    %1461 = vmatpush.msra.mxu0 0.0
    %1462 = vmatpush.msra.mxu0 0.0
    %1463 = vmatpush.msra.mxu0 0.0
    %1464 = vmatpush.msra.mxu0 0.0
    %1465 = vmatpush.msra.mxu0 0.0
    %1466 = vmatpush.msra.mxu0 %v1449
    %1467 = vmatpush.msra.mxu0 %v1448
    %1468 = vmatpush.msra.mxu0 %v1447
    %1469 = vmatpush.msra.mxu0 %v1446
    %1470 = vmatpush.msra.mxu0 %v1445
    %1471 = vmatpush.msra.mxu0 %v1444
    %1472 = vmatpush.msra.mxu0 %v1443
    %1473 = vmatpush.msra.mxu0 %v1442
    %1474 = vmatmul.f32.gmra.mxu0 %v1456
    %v1475 = vpop.f32.mrf.mxu0
    %v1476 = vadd.f32 %v1452, %v1475
    %1477 = vdwg.mxu0
    %vm1478 = vcmask 58368
    %1479 = vst.msk [vmem:[#allocation6] sm:$0x3] %vm1478, %v1476
    // Predicated region
    $region42: #{lstm_model_forward.1} parent=1 // pred_check
      _
    $region43: #{lstm_model_forward.1} parent=1 // pred_check_branch
      %1481 = sbr.rel (0) target = $region45
    $region44: #{lstm_model_forward.1} parent=1 // pred_region
      %1483 = vsyncadd [#allocation5], 0
      %s1485 = sshll.u32 [#allocation6], 4
      %s1486 = int_to_ptr.vmem [resolvable:$true] %s1485
      %s1487 = sshll.u32 %s9, 4
      %s1488 = int_to_ptr.hbm [resolvable:$true] %s1487
      %1490 = dma.vmem_to_hbm [thread:$0]  %s1486, 32, %s1488, [#allocation5]
    $region45: #{lstm_model_forward.1} parent=1 // pred_fallthru
      _
    // Predicated region
    $region46: #{lstm_model_forward.1} parent=1 // pred_check
      _
    $region47: #{lstm_model_forward.1} parent=1 // pred_check_branch
      %1492 = sbr.rel (0) target = $region49
    $region48: #{lstm_model_forward.1} parent=1 // pred_region
      %1494 = dma.done [#allocation5], 32
    $region49: #{lstm_model_forward.1} parent=1 // pred_fallthru
      _
    %1495 = vsyncpa [#allocation4], 1
    %1496 = vsyncpa [#allocation5], 1

</llo_original>
